<compile_context>
chip_gen: v7x
topology: tpu7x:2x2x1
jax: 0.10.0
libtpu: 0.0.40
codegen_flags: <defaults>
</compile_context>

<pallas_src>
import jax
import jax.numpy as jnp
from jax.experimental import pallas as pl
from jax.experimental.pallas import tpu as pltpu


# ----------------------------- Fused Seq2Seq kernel -----------------------------
def seq2seq_kernel(x_ref, xy0_ref, w_ref, b_ref, out_ref):
    # x_ref   : (T*B, F)      flattened time-major encoder input
    # xy0_ref : (B, n_out)    first decoder input (xy[0])
    # w_ref   : (5, R, 4H)    [Wx_enc | Wh_enc | Wx_dec | Wh_dec | W_out_pad] (rows zero-padded to R)
    # b_ref   : (3, B, 4H)    [b_enc | b_dec | b_out_pad], pre-tiled to batch
    # out_ref : (label_len, B, n_out)
    TB, F = x_ref.shape
    B, n_out = xy0_ref.shape
    label_len = out_ref.shape[0]
    GW = w_ref.shape[2]
    H = GW // 4
    T = TB // B
    f32 = jnp.float32

    # Load packed weight blocks once; they stay VMEM/vreg-resident for the whole kernel.
    wx_enc = w_ref[0][0:F, :]        # (F, 4H)   columns: [r | z | i_n | 0]
    wh_enc = w_ref[1][0:H, :]        # (H, 4H)   columns: [r | z | 0 | h_n]
    wx_dec = w_ref[2][0:n_out, :]    # (n_out, 4H)
    wh_dec = w_ref[3][0:H, :]        # (H, 4H)
    w_outp = w_ref[4][0:H, :]        # (H, 4H)   only first n_out columns nonzero

    # Biases already tiled to (B, 4H) at trace time -> no broadcast inside the loops.
    b_enc = b_ref[0]
    b_dec = b_ref[1]
    b_out = b_ref[2]

    def gru_update(g, h):
        # g columns: [r_sum | z_sum | i_n(+b_in) | h_n(+b_hn)]
        rz = jax.nn.sigmoid(g[:, 0:2 * H])          # one fused EUP push for r and z
        r = rz[:, 0:H]
        z = rz[:, H:2 * H]
        n = jnp.tanh(g[:, 2 * H:3 * H] + r * g[:, 3 * H:4 * H])
        return (1.0 - z) * n + z * h

    # ---------------- Encoder ----------------
    # All T input projections in ONE batched MXU matmul, off the serial chain.
    gi_all = jnp.dot(x_ref[...], wx_enc, preferred_element_type=f32)   # (T*B, 4H)

    h = jnp.zeros((B, H), f32)
    for t in range(T):                               # static unroll, T = 8
        g = (jnp.dot(h, wh_enc, preferred_element_type=f32)
             + gi_all[t * B:(t + 1) * B, :] + b_enc)
        h = gru_update(g, h)

    # ---------------- Decoder (teacher_forcing = 0: feed back own predictions) ---------
    inp = xy0_ref[...]
    for t in range(label_len):                       # static unroll, label_len = 4
        g = (jnp.dot(inp, wx_dec, preferred_element_type=f32)
             + jnp.dot(h, wh_dec, preferred_element_type=f32) + b_dec)
        h = gru_update(g, h)
        y = jnp.dot(h, w_outp, preferred_element_type=f32) + b_out     # (B, 4H), lane-dense matmul
        y = y[:, 0:n_out]
        out_ref[t] = y            # static-index store into VMEM-resident output slab
        inp = y


# ----------------------------- Weight packing (trace time) -----------------------------
def _pack_gru(w_ih, w_hh, b_ih, b_hh):
    """Repack PyTorch-style GRU weights (already transposed to [in, 3H] / [H, 3H]) into
    lane-aligned 4H-wide blocks with columns [ r | z | i_n | h_n ]:
      Wx = [W_ir | W_iz | W_in | 0],  Wh = [W_hr | W_hz | 0 | W_hn],
      b  = [b_ir+b_hr | b_iz+b_hz | b_in | b_hn].
    i_n and h_n stay in separate column blocks so n = tanh(i_n + b_in + r*(h_n + b_hn))
    matches nn.GRU exactly."""
    F = w_ih.shape[0]
    H = w_hh.shape[0]
    wx = jnp.concatenate([w_ih[:, 0:2 * H], w_ih[:, 2 * H:3 * H],
                          jnp.zeros((F, H), jnp.float32)], axis=1)      # (F, 4H)
    wh = jnp.concatenate([w_hh[:, 0:2 * H], jnp.zeros((H, H), jnp.float32),
                          w_hh[:, 2 * H:3 * H]], axis=1)                # (H, 4H)
    b = jnp.concatenate([b_ih[:, 0:2 * H] + b_hh[:, 0:2 * H],
                         b_ih[:, 2 * H:3 * H], b_hh[:, 2 * H:3 * H]], axis=1)  # (1, 4H)
    return wx, wh, b


# ----------------------------- Seq2Seq wrapper -----------------------------
def seq2seq_forward(params, x, xy, label_len):
    T, B, F = x.shape
    H = params["enc_whh"].shape[0]
    n_out = params["out_w"].shape[1]
    GW = 4 * H
    R = max(H, F, n_out)

    wx_e, wh_e, b_e = _pack_gru(params["enc_wih"], params["enc_whh"],
                                params["enc_bih"], params["enc_bhh"])
    wx_d, wh_d, b_d = _pack_gru(params["dec_wih"], params["dec_whh"],
                                params["dec_bih"], params["dec_bhh"])
    w_outp = jnp.pad(params["out_w"], ((0, 0), (0, GW - n_out)))        # (H, 4H)
    b_outp = jnp.pad(params["out_b"], ((0, 0), (0, GW - n_out)))        # (1, 4H)

    def pad_rows(w):
        return jnp.pad(w, ((0, R - w.shape[0]), (0, 0)))

    # One weight slab + one bias slab -> 4 input DMAs total (x, xy0, w_all, b_all).
    w_all = jnp.stack([pad_rows(wx_e), pad_rows(wh_e), pad_rows(wx_d),
                       pad_rows(wh_d), pad_rows(w_outp)], axis=0)       # (5, R, 4H)
    b_all = jnp.stack([jnp.tile(b_e, (B, 1)), jnp.tile(b_d, (B, 1)),
                       jnp.tile(b_outp, (B, 1))], axis=0)               # (3, B, 4H)

    x2d = x.reshape(T * B, F)
    xy0 = xy[0]

    vmem = pl.BlockSpec(memory_space=pltpu.MemorySpace.VMEM)
    return pl.pallas_call(
        seq2seq_kernel,
        out_shape=jax.ShapeDtypeStruct((label_len, B, n_out), jnp.float32),
        in_specs=[vmem, vmem, vmem, vmem],
        out_specs=vmem,
    )(x2d, xy0, w_all, b_all)


# ----------------------------- Pure-JAX reference (verification) -----------------------------
def _gru_cell_ref(x_t, h, w_ih, w_hh, b_ih, b_hh, H):
    gi = x_t @ w_ih + b_ih
    gh = h @ w_hh + b_hh
    i_r, i_z, i_n = gi[:, 0:H], gi[:, H:2 * H], gi[:, 2 * H:3 * H]
    h_r, h_z, h_n = gh[:, 0:H], gh[:, H:2 * H], gh[:, 2 * H:3 * H]
    r = jax.nn.sigmoid(i_r + h_r)
    z = jax.nn.sigmoid(i_z + h_z)
    n = jnp.tanh(i_n + r * h_n)
    return (1.0 - z) * n + z * h


def _ref_forward(params, x, xy, label_len):
    H = params["enc_whh"].shape[0]
    h = jnp.zeros((x.shape[1], H), jnp.float32)
    for t in range(x.shape[0]):
        h = _gru_cell_ref(x[t], h, params["enc_wih"], params["enc_whh"],
                          params["enc_bih"], params["enc_bhh"], H)
    inp = xy[0]
    outs = []
    for _ in range(label_len):
        h = _gru_cell_ref(inp, h, params["dec_wih"], params["dec_whh"],
                          params["dec_bih"], params["dec_bhh"], H)
        y = inp = h @ params["out_w"] + params["out_b"]
        outs.append(y)
    return jnp.stack(outs, axis=0)


# ----------------------------- Parameter init -----------------------------
def init_params(key, n_features, n_output, hidden_size):
    H = hidden_size
    ks = jax.random.split(key, 10)
    s = 1.0 / jnp.sqrt(H)
    u = lambda k, shape: jax.random.uniform(k, shape, jnp.float32, -s, s)
    return {
        # encoder GRU (input_size = n_features), weights pre-transposed to [in, 3H]
        "enc_wih": u(ks[0], (n_features, 3 * H)),
        "enc_whh": u(ks[1], (H, 3 * H)),
        "enc_bih": u(ks[2], (1, 3 * H)),
        "enc_bhh": u(ks[3], (1, 3 * H)),
        # decoder GRU (input_size = n_output)
        "dec_wih": u(ks[4], (n_output, 3 * H)),
        "dec_whh": u(ks[5], (H, 3 * H)),
        "dec_bih": u(ks[6], (1, 3 * H)),
        "dec_bhh": u(ks[7], (1, 3 * H)),
        # output Linear(hidden_size, n_output)
        "out_w": u(ks[8], (H, n_output)),
        "out_b": u(ks[9], (1, n_output)),
    }


if __name__ == "__main__":
    seq_len, label_len = 8, 4
    n_features, n_output = 4, 4
    hidden_size = 32
    batch = 2

    key = jax.random.PRNGKey(0)
    kp, kx, ky = jax.random.split(key, 3)
    params = init_params(kp, n_features, n_output, hidden_size)

    x = jax.random.normal(kx, (seq_len, batch, n_features), jnp.float32)
    xy = jax.random.normal(ky, (label_len, batch, n_output), jnp.float32)

    fwd = jax.jit(seq2seq_forward, static_argnames=("label_len",))
    out = jax.block_until_ready(fwd(params, x, xy, label_len))

    ref = _ref_forward(params, x, xy, label_len)
    assert out.shape == (label_len, batch, n_output)
    assert jnp.allclose(out, ref, atol=1e-5, rtol=1e-5), float(jnp.max(jnp.abs(out - ref)))

    print("KERNEL_OK")
</pallas_src>

<mosaic_0001>
module attributes {stable_mosaic.version = 11 : i64} {
  func.func @seq2seq_kernel(%arg0: memref<16x4xf32, #tpu.memory_space<vmem>>, %arg1: memref<2x4xf32, #tpu.memory_space<vmem>>, %arg2: memref<5x32x128xf32, #tpu.memory_space<vmem>>, %arg3: memref<3x2x128xf32, #tpu.memory_space<vmem>>, %arg4: memref<4x2x4xf32, #tpu.memory_space<vmem>>) attributes {dimension_semantics = [], scalar_prefetch = 0 : i64, scratch_operands = 0 : i64, tpu.core_type = #tpu.core_type<tc>} {
    %c0 = arith.constant 0 : index
    %c0_0 = arith.constant 0 : index
    %c0_1 = arith.constant 0 : index
    %0 = vector.load %arg2[%c0, %c0_0, %c0_1] : memref<5x32x128xf32, #tpu.memory_space<vmem>>, vector<1x32x128xf32>
    %1 = vector.shape_cast %0 : vector<1x32x128xf32> to vector<32x128xf32>
    %2 = vector.extract_strided_slice %1 {offsets = [0, 0], sizes = [4, 128], strides = [1, 1]} : vector<32x128xf32> to vector<4x128xf32>
    %c1 = arith.constant 1 : index
    %c0_2 = arith.constant 0 : index
    %c0_3 = arith.constant 0 : index
    %3 = vector.load %arg2[%c1, %c0_2, %c0_3] : memref<5x32x128xf32, #tpu.memory_space<vmem>>, vector<1x32x128xf32>
    %4 = vector.shape_cast %3 : vector<1x32x128xf32> to vector<32x128xf32>
    %c2 = arith.constant 2 : index
    %c0_4 = arith.constant 0 : index
    %c0_5 = arith.constant 0 : index
    %5 = vector.load %arg2[%c2, %c0_4, %c0_5] : memref<5x32x128xf32, #tpu.memory_space<vmem>>, vector<1x32x128xf32>
    %6 = vector.shape_cast %5 : vector<1x32x128xf32> to vector<32x128xf32>
    %7 = vector.extract_strided_slice %6 {offsets = [0, 0], sizes = [4, 128], strides = [1, 1]} : vector<32x128xf32> to vector<4x128xf32>
    %c3 = arith.constant 3 : index
    %c0_6 = arith.constant 0 : index
    %c0_7 = arith.constant 0 : index
    %8 = vector.load %arg2[%c3, %c0_6, %c0_7] : memref<5x32x128xf32, #tpu.memory_space<vmem>>, vector<1x32x128xf32>
    %9 = vector.shape_cast %8 : vector<1x32x128xf32> to vector<32x128xf32>
    %c4 = arith.constant 4 : index
    %c0_8 = arith.constant 0 : index
    %c0_9 = arith.constant 0 : index
    %10 = vector.load %arg2[%c4, %c0_8, %c0_9] : memref<5x32x128xf32, #tpu.memory_space<vmem>>, vector<1x32x128xf32>
    %11 = vector.shape_cast %10 : vector<1x32x128xf32> to vector<32x128xf32>
    %c0_10 = arith.constant 0 : index
    %c0_11 = arith.constant 0 : index
    %c0_12 = arith.constant 0 : index
    %12 = vector.load %arg3[%c0_10, %c0_11, %c0_12] : memref<3x2x128xf32, #tpu.memory_space<vmem>>, vector<1x2x128xf32>
    %13 = vector.shape_cast %12 : vector<1x2x128xf32> to vector<2x128xf32>
    %c1_13 = arith.constant 1 : index
    %c0_14 = arith.constant 0 : index
    %c0_15 = arith.constant 0 : index
    %14 = vector.load %arg3[%c1_13, %c0_14, %c0_15] : memref<3x2x128xf32, #tpu.memory_space<vmem>>, vector<1x2x128xf32>
    %15 = vector.shape_cast %14 : vector<1x2x128xf32> to vector<2x128xf32>
    %c2_16 = arith.constant 2 : index
    %c0_17 = arith.constant 0 : index
    %c0_18 = arith.constant 0 : index
    %16 = vector.load %arg3[%c2_16, %c0_17, %c0_18] : memref<3x2x128xf32, #tpu.memory_space<vmem>>, vector<1x2x128xf32>
    %17 = vector.shape_cast %16 : vector<1x2x128xf32> to vector<2x128xf32>
    %c0_19 = arith.constant 0 : index
    %c0_20 = arith.constant 0 : index
    %18 = vector.load %arg0[%c0_19, %c0_20] : memref<16x4xf32, #tpu.memory_space<vmem>>, vector<16x4xf32>
    %cst = arith.constant dense<0.000000e+00> : vector<16x128xf32>
    %19 = tpu.matmul %18, %2, %cst {dimension_numbers = #tpu.dot_dimension_numbers<[1], [0], [0], [1], [0, 0, 1, 1], [], []>} : vector<16x4xf32>, vector<4x128xf32>, vector<16x128xf32> -> vector<16x128xf32>
    %cst_21 = arith.constant 0.000000e+00 : f32
    %20 = vector.broadcast %cst_21 : f32 to vector<2x32xf32>
    %cst_22 = arith.constant dense<0.000000e+00> : vector<2x128xf32>
    %21 = tpu.matmul %20, %4, %cst_22 {dimension_numbers = #tpu.dot_dimension_numbers<[1], [0], [0], [1], [0, 0, 1, 1], [], []>} : vector<2x32xf32>, vector<32x128xf32>, vector<2x128xf32> -> vector<2x128xf32>
    %22 = vector.extract_strided_slice %19 {offsets = [0, 0], sizes = [2, 128], strides = [1, 1]} : vector<16x128xf32> to vector<2x128xf32>
    %23 = arith.addf %21, %22 : vector<2x128xf32>
    %24 = arith.addf %23, %13 : vector<2x128xf32>
    %25 = vector.extract_strided_slice %24 {offsets = [0, 0], sizes = [2, 64], strides = [1, 1]} : vector<2x128xf32> to vector<2x64xf32>
    %26 = arith.negf %25 : vector<2x64xf32>
    %27 = math.exp %26 : vector<2x64xf32>
    %cst_23 = arith.constant 1.000000e+00 : f32
    %28 = vector.broadcast %cst_23 : f32 to vector<2x64xf32>
    %29 = arith.addf %28, %27 : vector<2x64xf32>
    %30 = arith.divf %28, %29 : vector<2x64xf32>
    %31 = vector.extract_strided_slice %30 {offsets = [0, 0], sizes = [2, 32], strides = [1, 1]} : vector<2x64xf32> to vector<2x32xf32>
    %32 = vector.extract_strided_slice %30 {offsets = [0, 32], sizes = [2, 32], strides = [1, 1]} : vector<2x64xf32> to vector<2x32xf32>
    %33 = vector.extract_strided_slice %24 {offsets = [0, 64], sizes = [2, 32], strides = [1, 1]} : vector<2x128xf32> to vector<2x32xf32>
    %34 = vector.extract_strided_slice %24 {offsets = [0, 96], sizes = [2, 32], strides = [1, 1]} : vector<2x128xf32> to vector<2x32xf32>
    %35 = arith.mulf %31, %34 : vector<2x32xf32>
    %36 = arith.addf %33, %35 : vector<2x32xf32>
    %37 = math.tanh %36 : vector<2x32xf32>
    %cst_24 = arith.constant 1.000000e+00 : f32
    %38 = vector.broadcast %cst_24 : f32 to vector<2x32xf32>
    %39 = arith.subf %38, %32 : vector<2x32xf32>
    %40 = arith.mulf %39, %37 : vector<2x32xf32>
    %41 = arith.mulf %32, %20 : vector<2x32xf32>
    %42 = arith.addf %40, %41 : vector<2x32xf32>
    %cst_25 = arith.constant dense<0.000000e+00> : vector<2x128xf32>
    %43 = tpu.matmul %42, %4, %cst_25 {dimension_numbers = #tpu.dot_dimension_numbers<[1], [0], [0], [1], [0, 0, 1, 1], [], []>} : vector<2x32xf32>, vector<32x128xf32>, vector<2x128xf32> -> vector<2x128xf32>
    %44 = vector.extract_strided_slice %19 {offsets = [2, 0], sizes = [2, 128], strides = [1, 1]} : vector<16x128xf32> to vector<2x128xf32>
    %45 = arith.addf %43, %44 : vector<2x128xf32>
    %46 = arith.addf %45, %13 : vector<2x128xf32>
    %47 = vector.extract_strided_slice %46 {offsets = [0, 0], sizes = [2, 64], strides = [1, 1]} : vector<2x128xf32> to vector<2x64xf32>
    %48 = arith.negf %47 : vector<2x64xf32>
    %49 = math.exp %48 : vector<2x64xf32>
    %cst_26 = arith.constant 1.000000e+00 : f32
    %50 = vector.broadcast %cst_26 : f32 to vector<2x64xf32>
    %51 = arith.addf %50, %49 : vector<2x64xf32>
    %52 = arith.divf %50, %51 : vector<2x64xf32>
    %53 = vector.extract_strided_slice %52 {offsets = [0, 0], sizes = [2, 32], strides = [1, 1]} : vector<2x64xf32> to vector<2x32xf32>
    %54 = vector.extract_strided_slice %52 {offsets = [0, 32], sizes = [2, 32], strides = [1, 1]} : vector<2x64xf32> to vector<2x32xf32>
    %55 = vector.extract_strided_slice %46 {offsets = [0, 64], sizes = [2, 32], strides = [1, 1]} : vector<2x128xf32> to vector<2x32xf32>
    %56 = vector.extract_strided_slice %46 {offsets = [0, 96], sizes = [2, 32], strides = [1, 1]} : vector<2x128xf32> to vector<2x32xf32>
    %57 = arith.mulf %53, %56 : vector<2x32xf32>
    %58 = arith.addf %55, %57 : vector<2x32xf32>
    %59 = math.tanh %58 : vector<2x32xf32>
    %cst_27 = arith.constant 1.000000e+00 : f32
    %60 = vector.broadcast %cst_27 : f32 to vector<2x32xf32>
    %61 = arith.subf %60, %54 : vector<2x32xf32>
    %62 = arith.mulf %61, %59 : vector<2x32xf32>
    %63 = arith.mulf %54, %42 : vector<2x32xf32>
    %64 = arith.addf %62, %63 : vector<2x32xf32>
    %cst_28 = arith.constant dense<0.000000e+00> : vector<2x128xf32>
    %65 = tpu.matmul %64, %4, %cst_28 {dimension_numbers = #tpu.dot_dimension_numbers<[1], [0], [0], [1], [0, 0, 1, 1], [], []>} : vector<2x32xf32>, vector<32x128xf32>, vector<2x128xf32> -> vector<2x128xf32>
    %66 = vector.extract_strided_slice %19 {offsets = [4, 0], sizes = [2, 128], strides = [1, 1]} : vector<16x128xf32> to vector<2x128xf32>
    %67 = arith.addf %65, %66 : vector<2x128xf32>
    %68 = arith.addf %67, %13 : vector<2x128xf32>
    %69 = vector.extract_strided_slice %68 {offsets = [0, 0], sizes = [2, 64], strides = [1, 1]} : vector<2x128xf32> to vector<2x64xf32>
    %70 = arith.negf %69 : vector<2x64xf32>
    %71 = math.exp %70 : vector<2x64xf32>
    %cst_29 = arith.constant 1.000000e+00 : f32
    %72 = vector.broadcast %cst_29 : f32 to vector<2x64xf32>
    %73 = arith.addf %72, %71 : vector<2x64xf32>
    %74 = arith.divf %72, %73 : vector<2x64xf32>
    %75 = vector.extract_strided_slice %74 {offsets = [0, 0], sizes = [2, 32], strides = [1, 1]} : vector<2x64xf32> to vector<2x32xf32>
    %76 = vector.extract_strided_slice %74 {offsets = [0, 32], sizes = [2, 32], strides = [1, 1]} : vector<2x64xf32> to vector<2x32xf32>
    %77 = vector.extract_strided_slice %68 {offsets = [0, 64], sizes = [2, 32], strides = [1, 1]} : vector<2x128xf32> to vector<2x32xf32>
    %78 = vector.extract_strided_slice %68 {offsets = [0, 96], sizes = [2, 32], strides = [1, 1]} : vector<2x128xf32> to vector<2x32xf32>
    %79 = arith.mulf %75, %78 : vector<2x32xf32>
    %80 = arith.addf %77, %79 : vector<2x32xf32>
    %81 = math.tanh %80 : vector<2x32xf32>
    %cst_30 = arith.constant 1.000000e+00 : f32
    %82 = vector.broadcast %cst_30 : f32 to vector<2x32xf32>
    %83 = arith.subf %82, %76 : vector<2x32xf32>
    %84 = arith.mulf %83, %81 : vector<2x32xf32>
    %85 = arith.mulf %76, %64 : vector<2x32xf32>
    %86 = arith.addf %84, %85 : vector<2x32xf32>
    %cst_31 = arith.constant dense<0.000000e+00> : vector<2x128xf32>
    %87 = tpu.matmul %86, %4, %cst_31 {dimension_numbers = #tpu.dot_dimension_numbers<[1], [0], [0], [1], [0, 0, 1, 1], [], []>} : vector<2x32xf32>, vector<32x128xf32>, vector<2x128xf32> -> vector<2x128xf32>
    %88 = vector.extract_strided_slice %19 {offsets = [6, 0], sizes = [2, 128], strides = [1, 1]} : vector<16x128xf32> to vector<2x128xf32>
    %89 = arith.addf %87, %88 : vector<2x128xf32>
    %90 = arith.addf %89, %13 : vector<2x128xf32>
    %91 = vector.extract_strided_slice %90 {offsets = [0, 0], sizes = [2, 64], strides = [1, 1]} : vector<2x128xf32> to vector<2x64xf32>
    %92 = arith.negf %91 : vector<2x64xf32>
    %93 = math.exp %92 : vector<2x64xf32>
    %cst_32 = arith.constant 1.000000e+00 : f32
    %94 = vector.broadcast %cst_32 : f32 to vector<2x64xf32>
    %95 = arith.addf %94, %93 : vector<2x64xf32>
    %96 = arith.divf %94, %95 : vector<2x64xf32>
    %97 = vector.extract_strided_slice %96 {offsets = [0, 0], sizes = [2, 32], strides = [1, 1]} : vector<2x64xf32> to vector<2x32xf32>
    %98 = vector.extract_strided_slice %96 {offsets = [0, 32], sizes = [2, 32], strides = [1, 1]} : vector<2x64xf32> to vector<2x32xf32>
    %99 = vector.extract_strided_slice %90 {offsets = [0, 64], sizes = [2, 32], strides = [1, 1]} : vector<2x128xf32> to vector<2x32xf32>
    %100 = vector.extract_strided_slice %90 {offsets = [0, 96], sizes = [2, 32], strides = [1, 1]} : vector<2x128xf32> to vector<2x32xf32>
    %101 = arith.mulf %97, %100 : vector<2x32xf32>
    %102 = arith.addf %99, %101 : vector<2x32xf32>
    %103 = math.tanh %102 : vector<2x32xf32>
    %cst_33 = arith.constant 1.000000e+00 : f32
    %104 = vector.broadcast %cst_33 : f32 to vector<2x32xf32>
    %105 = arith.subf %104, %98 : vector<2x32xf32>
    %106 = arith.mulf %105, %103 : vector<2x32xf32>
    %107 = arith.mulf %98, %86 : vector<2x32xf32>
    %108 = arith.addf %106, %107 : vector<2x32xf32>
    %cst_34 = arith.constant dense<0.000000e+00> : vector<2x128xf32>
    %109 = tpu.matmul %108, %4, %cst_34 {dimension_numbers = #tpu.dot_dimension_numbers<[1], [0], [0], [1], [0, 0, 1, 1], [], []>} : vector<2x32xf32>, vector<32x128xf32>, vector<2x128xf32> -> vector<2x128xf32>
    %110 = vector.extract_strided_slice %19 {offsets = [8, 0], sizes = [2, 128], strides = [1, 1]} : vector<16x128xf32> to vector<2x128xf32>
    %111 = arith.addf %109, %110 : vector<2x128xf32>
    %112 = arith.addf %111, %13 : vector<2x128xf32>
    %113 = vector.extract_strided_slice %112 {offsets = [0, 0], sizes = [2, 64], strides = [1, 1]} : vector<2x128xf32> to vector<2x64xf32>
    %114 = arith.negf %113 : vector<2x64xf32>
    %115 = math.exp %114 : vector<2x64xf32>
    %cst_35 = arith.constant 1.000000e+00 : f32
    %116 = vector.broadcast %cst_35 : f32 to vector<2x64xf32>
    %117 = arith.addf %116, %115 : vector<2x64xf32>
    %118 = arith.divf %116, %117 : vector<2x64xf32>
    %119 = vector.extract_strided_slice %118 {offsets = [0, 0], sizes = [2, 32], strides = [1, 1]} : vector<2x64xf32> to vector<2x32xf32>
    %120 = vector.extract_strided_slice %118 {offsets = [0, 32], sizes = [2, 32], strides = [1, 1]} : vector<2x64xf32> to vector<2x32xf32>
    %121 = vector.extract_strided_slice %112 {offsets = [0, 64], sizes = [2, 32], strides = [1, 1]} : vector<2x128xf32> to vector<2x32xf32>
    %122 = vector.extract_strided_slice %112 {offsets = [0, 96], sizes = [2, 32], strides = [1, 1]} : vector<2x128xf32> to vector<2x32xf32>
    %123 = arith.mulf %119, %122 : vector<2x32xf32>
    %124 = arith.addf %121, %123 : vector<2x32xf32>
    %125 = math.tanh %124 : vector<2x32xf32>
    %cst_36 = arith.constant 1.000000e+00 : f32
    %126 = vector.broadcast %cst_36 : f32 to vector<2x32xf32>
    %127 = arith.subf %126, %120 : vector<2x32xf32>
    %128 = arith.mulf %127, %125 : vector<2x32xf32>
    %129 = arith.mulf %120, %108 : vector<2x32xf32>
    %130 = arith.addf %128, %129 : vector<2x32xf32>
    %cst_37 = arith.constant dense<0.000000e+00> : vector<2x128xf32>
    %131 = tpu.matmul %130, %4, %cst_37 {dimension_numbers = #tpu.dot_dimension_numbers<[1], [0], [0], [1], [0, 0, 1, 1], [], []>} : vector<2x32xf32>, vector<32x128xf32>, vector<2x128xf32> -> vector<2x128xf32>
    %132 = vector.extract_strided_slice %19 {offsets = [10, 0], sizes = [2, 128], strides = [1, 1]} : vector<16x128xf32> to vector<2x128xf32>
    %133 = arith.addf %131, %132 : vector<2x128xf32>
    %134 = arith.addf %133, %13 : vector<2x128xf32>
    %135 = vector.extract_strided_slice %134 {offsets = [0, 0], sizes = [2, 64], strides = [1, 1]} : vector<2x128xf32> to vector<2x64xf32>
    %136 = arith.negf %135 : vector<2x64xf32>
    %137 = math.exp %136 : vector<2x64xf32>
    %cst_38 = arith.constant 1.000000e+00 : f32
    %138 = vector.broadcast %cst_38 : f32 to vector<2x64xf32>
    %139 = arith.addf %138, %137 : vector<2x64xf32>
    %140 = arith.divf %138, %139 : vector<2x64xf32>
    %141 = vector.extract_strided_slice %140 {offsets = [0, 0], sizes = [2, 32], strides = [1, 1]} : vector<2x64xf32> to vector<2x32xf32>
    %142 = vector.extract_strided_slice %140 {offsets = [0, 32], sizes = [2, 32], strides = [1, 1]} : vector<2x64xf32> to vector<2x32xf32>
    %143 = vector.extract_strided_slice %134 {offsets = [0, 64], sizes = [2, 32], strides = [1, 1]} : vector<2x128xf32> to vector<2x32xf32>
    %144 = vector.extract_strided_slice %134 {offsets = [0, 96], sizes = [2, 32], strides = [1, 1]} : vector<2x128xf32> to vector<2x32xf32>
    %145 = arith.mulf %141, %144 : vector<2x32xf32>
    %146 = arith.addf %143, %145 : vector<2x32xf32>
    %147 = math.tanh %146 : vector<2x32xf32>
    %cst_39 = arith.constant 1.000000e+00 : f32
    %148 = vector.broadcast %cst_39 : f32 to vector<2x32xf32>
    %149 = arith.subf %148, %142 : vector<2x32xf32>
    %150 = arith.mulf %149, %147 : vector<2x32xf32>
    %151 = arith.mulf %142, %130 : vector<2x32xf32>
    %152 = arith.addf %150, %151 : vector<2x32xf32>
    %cst_40 = arith.constant dense<0.000000e+00> : vector<2x128xf32>
    %153 = tpu.matmul %152, %4, %cst_40 {dimension_numbers = #tpu.dot_dimension_numbers<[1], [0], [0], [1], [0, 0, 1, 1], [], []>} : vector<2x32xf32>, vector<32x128xf32>, vector<2x128xf32> -> vector<2x128xf32>
    %154 = vector.extract_strided_slice %19 {offsets = [12, 0], sizes = [2, 128], strides = [1, 1]} : vector<16x128xf32> to vector<2x128xf32>
    %155 = arith.addf %153, %154 : vector<2x128xf32>
    %156 = arith.addf %155, %13 : vector<2x128xf32>
    %157 = vector.extract_strided_slice %156 {offsets = [0, 0], sizes = [2, 64], strides = [1, 1]} : vector<2x128xf32> to vector<2x64xf32>
    %158 = arith.negf %157 : vector<2x64xf32>
    %159 = math.exp %158 : vector<2x64xf32>
    %cst_41 = arith.constant 1.000000e+00 : f32
    %160 = vector.broadcast %cst_41 : f32 to vector<2x64xf32>
    %161 = arith.addf %160, %159 : vector<2x64xf32>
    %162 = arith.divf %160, %161 : vector<2x64xf32>
    %163 = vector.extract_strided_slice %162 {offsets = [0, 0], sizes = [2, 32], strides = [1, 1]} : vector<2x64xf32> to vector<2x32xf32>
    %164 = vector.extract_strided_slice %162 {offsets = [0, 32], sizes = [2, 32], strides = [1, 1]} : vector<2x64xf32> to vector<2x32xf32>
    %165 = vector.extract_strided_slice %156 {offsets = [0, 64], sizes = [2, 32], strides = [1, 1]} : vector<2x128xf32> to vector<2x32xf32>
    %166 = vector.extract_strided_slice %156 {offsets = [0, 96], sizes = [2, 32], strides = [1, 1]} : vector<2x128xf32> to vector<2x32xf32>
    %167 = arith.mulf %163, %166 : vector<2x32xf32>
    %168 = arith.addf %165, %167 : vector<2x32xf32>
    %169 = math.tanh %168 : vector<2x32xf32>
    %cst_42 = arith.constant 1.000000e+00 : f32
    %170 = vector.broadcast %cst_42 : f32 to vector<2x32xf32>
    %171 = arith.subf %170, %164 : vector<2x32xf32>
    %172 = arith.mulf %171, %169 : vector<2x32xf32>
    %173 = arith.mulf %164, %152 : vector<2x32xf32>
    %174 = arith.addf %172, %173 : vector<2x32xf32>
    %cst_43 = arith.constant dense<0.000000e+00> : vector<2x128xf32>
    %175 = tpu.matmul %174, %4, %cst_43 {dimension_numbers = #tpu.dot_dimension_numbers<[1], [0], [0], [1], [0, 0, 1, 1], [], []>} : vector<2x32xf32>, vector<32x128xf32>, vector<2x128xf32> -> vector<2x128xf32>
    %176 = vector.extract_strided_slice %19 {offsets = [14, 0], sizes = [2, 128], strides = [1, 1]} : vector<16x128xf32> to vector<2x128xf32>
    %177 = arith.addf %175, %176 : vector<2x128xf32>
    %178 = arith.addf %177, %13 : vector<2x128xf32>
    %179 = vector.extract_strided_slice %178 {offsets = [0, 0], sizes = [2, 64], strides = [1, 1]} : vector<2x128xf32> to vector<2x64xf32>
    %180 = arith.negf %179 : vector<2x64xf32>
    %181 = math.exp %180 : vector<2x64xf32>
    %cst_44 = arith.constant 1.000000e+00 : f32
    %182 = vector.broadcast %cst_44 : f32 to vector<2x64xf32>
    %183 = arith.addf %182, %181 : vector<2x64xf32>
    %184 = arith.divf %182, %183 : vector<2x64xf32>
    %185 = vector.extract_strided_slice %184 {offsets = [0, 0], sizes = [2, 32], strides = [1, 1]} : vector<2x64xf32> to vector<2x32xf32>
    %186 = vector.extract_strided_slice %184 {offsets = [0, 32], sizes = [2, 32], strides = [1, 1]} : vector<2x64xf32> to vector<2x32xf32>
    %187 = vector.extract_strided_slice %178 {offsets = [0, 64], sizes = [2, 32], strides = [1, 1]} : vector<2x128xf32> to vector<2x32xf32>
    %188 = vector.extract_strided_slice %178 {offsets = [0, 96], sizes = [2, 32], strides = [1, 1]} : vector<2x128xf32> to vector<2x32xf32>
    %189 = arith.mulf %185, %188 : vector<2x32xf32>
    %190 = arith.addf %187, %189 : vector<2x32xf32>
    %191 = math.tanh %190 : vector<2x32xf32>
    %cst_45 = arith.constant 1.000000e+00 : f32
    %192 = vector.broadcast %cst_45 : f32 to vector<2x32xf32>
    %193 = arith.subf %192, %186 : vector<2x32xf32>
    %194 = arith.mulf %193, %191 : vector<2x32xf32>
    %195 = arith.mulf %186, %174 : vector<2x32xf32>
    %196 = arith.addf %194, %195 : vector<2x32xf32>
    %c0_46 = arith.constant 0 : index
    %c0_47 = arith.constant 0 : index
    %197 = vector.load %arg1[%c0_46, %c0_47] : memref<2x4xf32, #tpu.memory_space<vmem>>, vector<2x4xf32>
    %cst_48 = arith.constant dense<0.000000e+00> : vector<2x128xf32>
    %198 = tpu.matmul %197, %7, %cst_48 {dimension_numbers = #tpu.dot_dimension_numbers<[1], [0], [0], [1], [0, 0, 1, 1], [], []>} : vector<2x4xf32>, vector<4x128xf32>, vector<2x128xf32> -> vector<2x128xf32>
    %cst_49 = arith.constant dense<0.000000e+00> : vector<2x128xf32>
    %199 = tpu.matmul %196, %9, %cst_49 {dimension_numbers = #tpu.dot_dimension_numbers<[1], [0], [0], [1], [0, 0, 1, 1], [], []>} : vector<2x32xf32>, vector<32x128xf32>, vector<2x128xf32> -> vector<2x128xf32>
    %200 = arith.addf %198, %199 : vector<2x128xf32>
    %201 = arith.addf %200, %15 : vector<2x128xf32>
    %202 = vector.extract_strided_slice %201 {offsets = [0, 0], sizes = [2, 64], strides = [1, 1]} : vector<2x128xf32> to vector<2x64xf32>
    %203 = arith.negf %202 : vector<2x64xf32>
    %204 = math.exp %203 : vector<2x64xf32>
    %cst_50 = arith.constant 1.000000e+00 : f32
    %205 = vector.broadcast %cst_50 : f32 to vector<2x64xf32>
    %206 = arith.addf %205, %204 : vector<2x64xf32>
    %207 = arith.divf %205, %206 : vector<2x64xf32>
    %208 = vector.extract_strided_slice %207 {offsets = [0, 0], sizes = [2, 32], strides = [1, 1]} : vector<2x64xf32> to vector<2x32xf32>
    %209 = vector.extract_strided_slice %207 {offsets = [0, 32], sizes = [2, 32], strides = [1, 1]} : vector<2x64xf32> to vector<2x32xf32>
    %210 = vector.extract_strided_slice %201 {offsets = [0, 64], sizes = [2, 32], strides = [1, 1]} : vector<2x128xf32> to vector<2x32xf32>
    %211 = vector.extract_strided_slice %201 {offsets = [0, 96], sizes = [2, 32], strides = [1, 1]} : vector<2x128xf32> to vector<2x32xf32>
    %212 = arith.mulf %208, %211 : vector<2x32xf32>
    %213 = arith.addf %210, %212 : vector<2x32xf32>
    %214 = math.tanh %213 : vector<2x32xf32>
    %cst_51 = arith.constant 1.000000e+00 : f32
    %215 = vector.broadcast %cst_51 : f32 to vector<2x32xf32>
    %216 = arith.subf %215, %209 : vector<2x32xf32>
    %217 = arith.mulf %216, %214 : vector<2x32xf32>
    %218 = arith.mulf %209, %196 : vector<2x32xf32>
    %219 = arith.addf %217, %218 : vector<2x32xf32>
    %cst_52 = arith.constant dense<0.000000e+00> : vector<2x128xf32>
    %220 = tpu.matmul %219, %11, %cst_52 {dimension_numbers = #tpu.dot_dimension_numbers<[1], [0], [0], [1], [0, 0, 1, 1], [], []>} : vector<2x32xf32>, vector<32x128xf32>, vector<2x128xf32> -> vector<2x128xf32>
    %221 = arith.addf %220, %17 : vector<2x128xf32>
    %222 = vector.extract_strided_slice %221 {offsets = [0, 0], sizes = [2, 4], strides = [1, 1]} : vector<2x128xf32> to vector<2x4xf32>
    %c0_53 = arith.constant 0 : index
    %c0_54 = arith.constant 0 : index
    %c0_55 = arith.constant 0 : index
    %223 = vector.load %arg4[%c0_53, %c0_54, %c0_55] : memref<4x2x4xf32, #tpu.memory_space<vmem>>, vector<1x2x4xf32>
    %224 = vector.shape_cast %223 : vector<1x2x4xf32> to vector<2x4xf32>
    %225 = vector.shape_cast %222 : vector<2x4xf32> to vector<1x2x4xf32>
    tpu.vector_store %arg4[%c0_53, %c0_54, %c0_55], %225 {strides = array<i32>} : memref<4x2x4xf32, #tpu.memory_space<vmem>>, vector<1x2x4xf32>,
    %cst_56 = arith.constant dense<0.000000e+00> : vector<2x128xf32>
    %226 = tpu.matmul %222, %7, %cst_56 {dimension_numbers = #tpu.dot_dimension_numbers<[1], [0], [0], [1], [0, 0, 1, 1], [], []>} : vector<2x4xf32>, vector<4x128xf32>, vector<2x128xf32> -> vector<2x128xf32>
    %cst_57 = arith.constant dense<0.000000e+00> : vector<2x128xf32>
    %227 = tpu.matmul %219, %9, %cst_57 {dimension_numbers = #tpu.dot_dimension_numbers<[1], [0], [0], [1], [0, 0, 1, 1], [], []>} : vector<2x32xf32>, vector<32x128xf32>, vector<2x128xf32> -> vector<2x128xf32>
    %228 = arith.addf %226, %227 : vector<2x128xf32>
    %229 = arith.addf %228, %15 : vector<2x128xf32>
    %230 = vector.extract_strided_slice %229 {offsets = [0, 0], sizes = [2, 64], strides = [1, 1]} : vector<2x128xf32> to vector<2x64xf32>
    %231 = arith.negf %230 : vector<2x64xf32>
    %232 = math.exp %231 : vector<2x64xf32>
    %cst_58 = arith.constant 1.000000e+00 : f32
    %233 = vector.broadcast %cst_58 : f32 to vector<2x64xf32>
    %234 = arith.addf %233, %232 : vector<2x64xf32>
    %235 = arith.divf %233, %234 : vector<2x64xf32>
    %236 = vector.extract_strided_slice %235 {offsets = [0, 0], sizes = [2, 32], strides = [1, 1]} : vector<2x64xf32> to vector<2x32xf32>
    %237 = vector.extract_strided_slice %235 {offsets = [0, 32], sizes = [2, 32], strides = [1, 1]} : vector<2x64xf32> to vector<2x32xf32>
    %238 = vector.extract_strided_slice %229 {offsets = [0, 64], sizes = [2, 32], strides = [1, 1]} : vector<2x128xf32> to vector<2x32xf32>
    %239 = vector.extract_strided_slice %229 {offsets = [0, 96], sizes = [2, 32], strides = [1, 1]} : vector<2x128xf32> to vector<2x32xf32>
    %240 = arith.mulf %236, %239 : vector<2x32xf32>
    %241 = arith.addf %238, %240 : vector<2x32xf32>
    %242 = math.tanh %241 : vector<2x32xf32>
    %cst_59 = arith.constant 1.000000e+00 : f32
    %243 = vector.broadcast %cst_59 : f32 to vector<2x32xf32>
    %244 = arith.subf %243, %237 : vector<2x32xf32>
    %245 = arith.mulf %244, %242 : vector<2x32xf32>
    %246 = arith.mulf %237, %219 : vector<2x32xf32>
    %247 = arith.addf %245, %246 : vector<2x32xf32>
    %cst_60 = arith.constant dense<0.000000e+00> : vector<2x128xf32>
    %248 = tpu.matmul %247, %11, %cst_60 {dimension_numbers = #tpu.dot_dimension_numbers<[1], [0], [0], [1], [0, 0, 1, 1], [], []>} : vector<2x32xf32>, vector<32x128xf32>, vector<2x128xf32> -> vector<2x128xf32>
    %249 = arith.addf %248, %17 : vector<2x128xf32>
    %250 = vector.extract_strided_slice %249 {offsets = [0, 0], sizes = [2, 4], strides = [1, 1]} : vector<2x128xf32> to vector<2x4xf32>
    %c1_61 = arith.constant 1 : index
    %c0_62 = arith.constant 0 : index
    %c0_63 = arith.constant 0 : index
    %251 = vector.load %arg4[%c1_61, %c0_62, %c0_63] : memref<4x2x4xf32, #tpu.memory_space<vmem>>, vector<1x2x4xf32>
    %252 = vector.shape_cast %251 : vector<1x2x4xf32> to vector<2x4xf32>
    %253 = vector.shape_cast %250 : vector<2x4xf32> to vector<1x2x4xf32>
    tpu.vector_store %arg4[%c1_61, %c0_62, %c0_63], %253 {strides = array<i32>} : memref<4x2x4xf32, #tpu.memory_space<vmem>>, vector<1x2x4xf32>,
    %cst_64 = arith.constant dense<0.000000e+00> : vector<2x128xf32>
    %254 = tpu.matmul %250, %7, %cst_64 {dimension_numbers = #tpu.dot_dimension_numbers<[1], [0], [0], [1], [0, 0, 1, 1], [], []>} : vector<2x4xf32>, vector<4x128xf32>, vector<2x128xf32> -> vector<2x128xf32>
    %cst_65 = arith.constant dense<0.000000e+00> : vector<2x128xf32>
    %255 = tpu.matmul %247, %9, %cst_65 {dimension_numbers = #tpu.dot_dimension_numbers<[1], [0], [0], [1], [0, 0, 1, 1], [], []>} : vector<2x32xf32>, vector<32x128xf32>, vector<2x128xf32> -> vector<2x128xf32>
    %256 = arith.addf %254, %255 : vector<2x128xf32>
    %257 = arith.addf %256, %15 : vector<2x128xf32>
    %258 = vector.extract_strided_slice %257 {offsets = [0, 0], sizes = [2, 64], strides = [1, 1]} : vector<2x128xf32> to vector<2x64xf32>
    %259 = arith.negf %258 : vector<2x64xf32>
    %260 = math.exp %259 : vector<2x64xf32>
    %cst_66 = arith.constant 1.000000e+00 : f32
    %261 = vector.broadcast %cst_66 : f32 to vector<2x64xf32>
    %262 = arith.addf %261, %260 : vector<2x64xf32>
    %263 = arith.divf %261, %262 : vector<2x64xf32>
    %264 = vector.extract_strided_slice %263 {offsets = [0, 0], sizes = [2, 32], strides = [1, 1]} : vector<2x64xf32> to vector<2x32xf32>
    %265 = vector.extract_strided_slice %263 {offsets = [0, 32], sizes = [2, 32], strides = [1, 1]} : vector<2x64xf32> to vector<2x32xf32>
    %266 = vector.extract_strided_slice %257 {offsets = [0, 64], sizes = [2, 32], strides = [1, 1]} : vector<2x128xf32> to vector<2x32xf32>
    %267 = vector.extract_strided_slice %257 {offsets = [0, 96], sizes = [2, 32], strides = [1, 1]} : vector<2x128xf32> to vector<2x32xf32>
    %268 = arith.mulf %264, %267 : vector<2x32xf32>
    %269 = arith.addf %266, %268 : vector<2x32xf32>
    %270 = math.tanh %269 : vector<2x32xf32>
    %cst_67 = arith.constant 1.000000e+00 : f32
    %271 = vector.broadcast %cst_67 : f32 to vector<2x32xf32>
    %272 = arith.subf %271, %265 : vector<2x32xf32>
    %273 = arith.mulf %272, %270 : vector<2x32xf32>
    %274 = arith.mulf %265, %247 : vector<2x32xf32>
    %275 = arith.addf %273, %274 : vector<2x32xf32>
    %cst_68 = arith.constant dense<0.000000e+00> : vector<2x128xf32>
    %276 = tpu.matmul %275, %11, %cst_68 {dimension_numbers = #tpu.dot_dimension_numbers<[1], [0], [0], [1], [0, 0, 1, 1], [], []>} : vector<2x32xf32>, vector<32x128xf32>, vector<2x128xf32> -> vector<2x128xf32>
    %277 = arith.addf %276, %17 : vector<2x128xf32>
    %278 = vector.extract_strided_slice %277 {offsets = [0, 0], sizes = [2, 4], strides = [1, 1]} : vector<2x128xf32> to vector<2x4xf32>
    %c2_69 = arith.constant 2 : index
    %c0_70 = arith.constant 0 : index
    %c0_71 = arith.constant 0 : index
    %279 = vector.load %arg4[%c2_69, %c0_70, %c0_71] : memref<4x2x4xf32, #tpu.memory_space<vmem>>, vector<1x2x4xf32>
    %280 = vector.shape_cast %279 : vector<1x2x4xf32> to vector<2x4xf32>
    %281 = vector.shape_cast %278 : vector<2x4xf32> to vector<1x2x4xf32>
    tpu.vector_store %arg4[%c2_69, %c0_70, %c0_71], %281 {strides = array<i32>} : memref<4x2x4xf32, #tpu.memory_space<vmem>>, vector<1x2x4xf32>,
    %cst_72 = arith.constant dense<0.000000e+00> : vector<2x128xf32>
    %282 = tpu.matmul %278, %7, %cst_72 {dimension_numbers = #tpu.dot_dimension_numbers<[1], [0], [0], [1], [0, 0, 1, 1], [], []>} : vector<2x4xf32>, vector<4x128xf32>, vector<2x128xf32> -> vector<2x128xf32>
    %cst_73 = arith.constant dense<0.000000e+00> : vector<2x128xf32>
    %283 = tpu.matmul %275, %9, %cst_73 {dimension_numbers = #tpu.dot_dimension_numbers<[1], [0], [0], [1], [0, 0, 1, 1], [], []>} : vector<2x32xf32>, vector<32x128xf32>, vector<2x128xf32> -> vector<2x128xf32>
    %284 = arith.addf %282, %283 : vector<2x128xf32>
    %285 = arith.addf %284, %15 : vector<2x128xf32>
    %286 = vector.extract_strided_slice %285 {offsets = [0, 0], sizes = [2, 64], strides = [1, 1]} : vector<2x128xf32> to vector<2x64xf32>
    %287 = arith.negf %286 : vector<2x64xf32>
    %288 = math.exp %287 : vector<2x64xf32>
    %cst_74 = arith.constant 1.000000e+00 : f32
    %289 = vector.broadcast %cst_74 : f32 to vector<2x64xf32>
    %290 = arith.addf %289, %288 : vector<2x64xf32>
    %291 = arith.divf %289, %290 : vector<2x64xf32>
    %292 = vector.extract_strided_slice %291 {offsets = [0, 0], sizes = [2, 32], strides = [1, 1]} : vector<2x64xf32> to vector<2x32xf32>
    %293 = vector.extract_strided_slice %291 {offsets = [0, 32], sizes = [2, 32], strides = [1, 1]} : vector<2x64xf32> to vector<2x32xf32>
    %294 = vector.extract_strided_slice %285 {offsets = [0, 64], sizes = [2, 32], strides = [1, 1]} : vector<2x128xf32> to vector<2x32xf32>
    %295 = vector.extract_strided_slice %285 {offsets = [0, 96], sizes = [2, 32], strides = [1, 1]} : vector<2x128xf32> to vector<2x32xf32>
    %296 = arith.mulf %292, %295 : vector<2x32xf32>
    %297 = arith.addf %294, %296 : vector<2x32xf32>
    %298 = math.tanh %297 : vector<2x32xf32>
    %cst_75 = arith.constant 1.000000e+00 : f32
    %299 = vector.broadcast %cst_75 : f32 to vector<2x32xf32>
    %300 = arith.subf %299, %293 : vector<2x32xf32>
    %301 = arith.mulf %300, %298 : vector<2x32xf32>
    %302 = arith.mulf %293, %275 : vector<2x32xf32>
    %303 = arith.addf %301, %302 : vector<2x32xf32>
    %cst_76 = arith.constant dense<0.000000e+00> : vector<2x128xf32>
    %304 = tpu.matmul %303, %11, %cst_76 {dimension_numbers = #tpu.dot_dimension_numbers<[1], [0], [0], [1], [0, 0, 1, 1], [], []>} : vector<2x32xf32>, vector<32x128xf32>, vector<2x128xf32> -> vector<2x128xf32>
    %305 = arith.addf %304, %17 : vector<2x128xf32>
    %306 = vector.extract_strided_slice %305 {offsets = [0, 0], sizes = [2, 4], strides = [1, 1]} : vector<2x128xf32> to vector<2x4xf32>
    %c3_77 = arith.constant 3 : index
    %c0_78 = arith.constant 0 : index
    %c0_79 = arith.constant 0 : index
    %307 = vector.load %arg4[%c3_77, %c0_78, %c0_79] : memref<4x2x4xf32, #tpu.memory_space<vmem>>, vector<1x2x4xf32>
    %308 = vector.shape_cast %307 : vector<1x2x4xf32> to vector<2x4xf32>
    %309 = vector.shape_cast %306 : vector<2x4xf32> to vector<1x2x4xf32>
    tpu.vector_store %arg4[%c3_77, %c0_78, %c0_79], %309 {strides = array<i32>} : memref<4x2x4xf32, #tpu.memory_space<vmem>>, vector<1x2x4xf32>,
    return
  }
}

</mosaic_0001>

<llo_original>
// kernel: seq2seq_forward.1
$region0: #{seq2seq_forward.1}
  #allocation0 [shape = 'u32[]', space=smem, size = 0x4, offset = 0x4, fixed_abs, tag = 'smem constant byte address 0x4 - core index']
  #allocation1 [shape = 'u32[144,128]{1,0:T(1,128)}', space=vmem, size = 0x12000, scoped, tag = 'internal scratch']
  %s0 = inlined_call_operand.vmem [shape: f32[16,4], index: 0, kind: input, shape index: {}]
  %s1 = inlined_call_operand.vmem [shape: f32[2,4], index: 1, kind: input, shape index: {}]
  %s2 = inlined_call_operand.vmem [shape: f32[5,32,128], index: 2, kind: input, shape index: {}]
  %s3 = inlined_call_operand.vmem [shape: f32[3,2,128], index: 3, kind: input, shape index: {}]
  %s4 = inlined_call_operand.hbm [shape: f32[4,2,4], index: 4, kind: output, shape index: {}]
  %s5 = sld [smem:[#allocation0]]
  $region26: #{seq2seq_forward.1} parent=0
    _
  %s7 = ssub.s32 1, %s5
  %s8 = scalar_select 0, %s7, %s5
  $region1: #{seq2seq_forward.1} parent=0
    #allocation2 [shape = 'u8[4096]{0}', space=vmem, size = 0x1000, scoped, tag = 'output window, operand 0, single buffered']
    #allocation3 [shape = 's32[1]{0}', space=sflag, size = 0x4, scoped, tag = 'scoped memory for seq2seq_forward.1']
    %9 = vsyncpa [#allocation3], 0
    // Predicated region
    $region2: #{seq2seq_forward.1} parent=1 // pred_check
      _
    $region3: #{seq2seq_forward.1} parent=1 // pred_check_branch
      %11 = sbr.rel (0) target = $region5
    $region4: #{seq2seq_forward.1} parent=1 // pred_region
      _
    $region5: #{seq2seq_forward.1} parent=1 // pred_fallthru
      _
    // Predicated region
    $region6: #{seq2seq_forward.1} parent=1 // pred_check
      _
    $region7: #{seq2seq_forward.1} parent=1 // pred_check_branch
      %13 = sbr.rel (0) target = $region9
    $region8: #{seq2seq_forward.1} parent=1 // pred_region
      _
    $region9: #{seq2seq_forward.1} parent=1 // pred_fallthru
      _
    // Predicated region
    $region10: #{seq2seq_forward.1} parent=1 // pred_check
      _
    $region11: #{seq2seq_forward.1} parent=1 // pred_check_branch
      %15 = sbr.rel (0) target = $region13
    $region12: #{seq2seq_forward.1} parent=1 // pred_region
      _
    $region13: #{seq2seq_forward.1} parent=1 // pred_fallthru
      _
    // Predicated region
    $region14: #{seq2seq_forward.1} parent=1 // pred_check
      _
    $region15: #{seq2seq_forward.1} parent=1 // pred_check_branch
      %17 = sbr.rel (0) target = $region17
    $region16: #{seq2seq_forward.1} parent=1 // pred_region
      _
    $region17: #{seq2seq_forward.1} parent=1 // pred_fallthru
      _
    %v18 = vld [vmem:[%s2] sm:$0xff]
    %s19 = scalar_lea.vmem %s2, 32
    %v20 = vld [vmem:[%s19] sm:$0xff]
    %v21 = vld [vmem:[%s19 + $0x8] sm:$0xff]
    %v22 = vld [vmem:[%s19 + $0x10] sm:$0xff]
    %v23 = vld [vmem:[%s19 + $0x18] sm:$0xff]
    %s24 = scalar_lea.vmem %s2, 64
    %v25 = vld [vmem:[%s24] sm:$0xff]
    %s26 = scalar_lea.vmem %s2, 96
    %v27 = vld [vmem:[%s26] sm:$0xff]
    %v28 = vld [vmem:[%s26 + $0x8] sm:$0xff]
    %v29 = vld [vmem:[%s26 + $0x10] sm:$0xff]
    %v30 = vld [vmem:[%s26 + $0x18] sm:$0xff]
    %s31 = scalar_lea.vmem %s2, 128
    %v32 = vld [vmem:[%s31] sm:$0xff]
    %v33 = vld [vmem:[%s31 + $0x8] sm:$0xff]
    %v34 = vld [vmem:[%s31 + $0x10] sm:$0xff]
    %v35 = vld [vmem:[%s31 + $0x18] sm:$0xff]
    %v36 = vld [vmem:[%s3] sm:$0x3]
    %s37 = scalar_lea.vmem %s3, 2
    %v38 = vld [vmem:[%s37] sm:$0x3]
    %s39 = scalar_lea.vmem %s3, 4
    %v40 = vld [vmem:[%s39] sm:$0x3]
    %v41 = vld [vmem:[%s0] sm:$0xff]
    %v42 = vld [vmem:[%s0 + $0x8] sm:$0xff]
    %vm43 = vcmask 31744
    %v45 = vsel %vm43, %v41, 0
    %v48 = vsel %vm43, %v42, 0
    %vm50 = vcmask 1043456
    %v52 = vsel %vm50, %v18, 0
    %54 = vmatprep.subr.mxu0 0.0
    %55 = vmatpush1.msra.mxu0 %v52
    %56 = vmatprep.subr.mxu0 0.0
    %57 = vmatpush1.msra.mxu0 0.0
    %58 = vmatprep.subr.mxu0 0.0
    %59 = vmatpush1.msra.mxu0 0.0
    %60 = vmatprep.subr.mxu0 0.0
    %61 = vmatpush1.msra.mxu0 0.0
    %62 = vmatprep.subr.mxu0 0.0
    %63 = vmatpush1.msra.mxu0 0.0
    %64 = vmatprep.subr.mxu0 0.0
    %65 = vmatpush1.msra.mxu0 0.0
    %66 = vmatprep.subr.mxu0 0.0
    %67 = vmatpush1.msra.mxu0 0.0
    %68 = vmatprep.subr.mxu0 0.0
    %69 = vmatpush1.msra.mxu0 0.0
    %70 = vmatprep.subr.mxu0 0.0
    %71 = vmatpush1.msra.mxu0 0.0
    %72 = vmatprep.subr.mxu0 0.0
    %73 = vmatpush1.msra.mxu0 0.0
    %74 = vmatprep.subr.mxu0 0.0
    %75 = vmatpush1.msra.mxu0 0.0
    %76 = vmatprep.subr.mxu0 0.0
    %77 = vmatpush1.msra.mxu0 0.0
    %78 = vmatprep.subr.mxu0 0.0
    %79 = vmatpush1.msra.mxu0 0.0
    %80 = vmatprep.subr.mxu0 0.0
    %81 = vmatpush1.msra.mxu0 0.0
    %82 = vmatprep.subr.mxu0 0.0
    %83 = vmatpush1.msra.mxu0 0.0
    %84 = vmatprep.subr.mxu0 0.0
    %85 = vmatpush1.msra.mxu0 0.0
    %86 = vmatprep.subr.mxu0 0.0
    %87 = vmatpush1.msra.mxu0 0.0
    %88 = vmatprep.subr.mxu0 0.0
    %89 = vmatpush1.msra.mxu0 0.0
    %90 = vmatprep.subr.mxu0 0.0
    %91 = vmatpush1.msra.mxu0 0.0
    %92 = vmatprep.subr.mxu0 0.0
    %93 = vmatpush1.msra.mxu0 0.0
    %94 = vmatprep.subr.mxu0 0.0
    %95 = vmatpush1.msra.mxu0 0.0
    %96 = vmatprep.subr.mxu0 0.0
    %97 = vmatpush1.msra.mxu0 0.0
    %98 = vmatprep.subr.mxu0 0.0
    %99 = vmatpush1.msra.mxu0 0.0
    %100 = vmatprep.subr.mxu0 0.0
    %101 = vmatpush1.msra.mxu0 0.0
    %102 = vmatprep.subr.mxu0 0.0
    %103 = vmatpush1.msra.mxu0 0.0
    %104 = vmatprep.subr.mxu0 0.0
    %105 = vmatpush1.msra.mxu0 0.0
    %106 = vmatprep.subr.mxu0 0.0
    %107 = vmatpush1.msra.mxu0 0.0
    %108 = vmatprep.subr.mxu0 0.0
    %109 = vmatpush1.msra.mxu0 0.0
    %110 = vmatprep.subr.mxu0 0.0
    %111 = vmatpush1.msra.mxu0 0.0
    %112 = vmatprep.subr.mxu0 0.0
    %113 = vmatpush1.msra.mxu0 0.0
    %114 = vmatprep.subr.mxu0 0.0
    %115 = vmatpush1.msra.mxu0 0.0
    %116 = vmatprep.subr.mxu0 0.0
    %117 = vmatpush1.msra.mxu0 0.0
    %118 = vmatprep.mubr.f32.mxu0 0.0
    %119 = vmatmul.mubr.f32.gmra.mrb[0].mxu0 %v45
    %v120 = vpop.f32.mrb[0].mxu0
    %v121 = vadd.f32 0.0, %v120
    %v122 = vpop.f32.mrb[0].mxu0
    %123 = vmatprep.mubr.f32.mxu0 0.0
    %124 = vmatmul.mubr.f32.gmra.mrb[0].mxu0 %v48
    %v125 = vpop.f32.mrb[0].mxu0
    %v126 = vadd.f32 0.0, %v125
    %v127 = vpop.f32.mrb[0].mxu0
    %128 = vdwg.mxu0
    %vm129 = vcmask 261120
    %v131 = vsel %vm129, 0.0, 0
    %133 = vmatprep.subr.mxu0 0.0
    %134 = vmatpush1.msra.mxu0 %v20
    %135 = vmatprep.subr.mxu0 0.0
    %136 = vmatpush1.msra.mxu0 %v21
    %137 = vmatprep.subr.mxu0 0.0
    %138 = vmatpush1.msra.mxu0 %v22
    %139 = vmatprep.subr.mxu0 0.0
    %140 = vmatpush1.msra.mxu0 %v23
    %141 = vmatprep.subr.mxu0 0.0
    %142 = vmatpush1.msra.mxu0 0.0
    %143 = vmatprep.subr.mxu0 0.0
    %144 = vmatpush1.msra.mxu0 0.0
    %145 = vmatprep.subr.mxu0 0.0
    %146 = vmatpush1.msra.mxu0 0.0
    %147 = vmatprep.subr.mxu0 0.0
    %148 = vmatpush1.msra.mxu0 0.0
    %149 = vmatprep.subr.mxu0 0.0
    %150 = vmatpush1.msra.mxu0 0.0
    %151 = vmatprep.subr.mxu0 0.0
    %152 = vmatpush1.msra.mxu0 0.0
    %153 = vmatprep.subr.mxu0 0.0
    %154 = vmatpush1.msra.mxu0 0.0
    %155 = vmatprep.subr.mxu0 0.0
    %156 = vmatpush1.msra.mxu0 0.0
    %157 = vmatprep.subr.mxu0 0.0
    %158 = vmatpush1.msra.mxu0 0.0
    %159 = vmatprep.subr.mxu0 0.0
    %160 = vmatpush1.msra.mxu0 0.0
    %161 = vmatprep.subr.mxu0 0.0
    %162 = vmatpush1.msra.mxu0 0.0
    %163 = vmatprep.subr.mxu0 0.0
    %164 = vmatpush1.msra.mxu0 0.0
    %165 = vmatprep.subr.mxu0 0.0
    %166 = vmatpush1.msra.mxu0 0.0
    %167 = vmatprep.subr.mxu0 0.0
    %168 = vmatpush1.msra.mxu0 0.0
    %169 = vmatprep.subr.mxu0 0.0
    %170 = vmatpush1.msra.mxu0 0.0
    %171 = vmatprep.subr.mxu0 0.0
    %172 = vmatpush1.msra.mxu0 0.0
    %173 = vmatprep.subr.mxu0 0.0
    %174 = vmatpush1.msra.mxu0 0.0
    %175 = vmatprep.subr.mxu0 0.0
    %176 = vmatpush1.msra.mxu0 0.0
    %177 = vmatprep.subr.mxu0 0.0
    %178 = vmatpush1.msra.mxu0 0.0
    %179 = vmatprep.subr.mxu0 0.0
    %180 = vmatpush1.msra.mxu0 0.0
    %181 = vmatprep.subr.mxu0 0.0
    %182 = vmatpush1.msra.mxu0 0.0
    %183 = vmatprep.subr.mxu0 0.0
    %184 = vmatpush1.msra.mxu0 0.0
    %185 = vmatprep.subr.mxu0 0.0
    %186 = vmatpush1.msra.mxu0 0.0
    %187 = vmatprep.subr.mxu0 0.0
    %188 = vmatpush1.msra.mxu0 0.0
    %189 = vmatprep.subr.mxu0 0.0
    %190 = vmatpush1.msra.mxu0 0.0
    %191 = vmatprep.subr.mxu0 0.0
    %192 = vmatpush1.msra.mxu0 0.0
    %193 = vmatprep.subr.mxu0 0.0
    %194 = vmatpush1.msra.mxu0 0.0
    %195 = vmatprep.subr.mxu0 0.0
    %196 = vmatpush1.msra.mxu0 0.0
    %197 = vmatprep.mubr.f32.mxu0 0.0
    %198 = vmatmul.mubr.f32.gmra.mrb[0].mxu0 %v131
    %v199 = vpop.f32.mrb[0].mxu0
    %v200 = vadd.f32 %v121, %v199
    %v201 = vpop.f32.mrb[0].mxu0
    %202 = vdwg.mxu0
    %v203 = vadd.f32 %v200, %v36
    %v204 = vxor.u32 %v203, 2147483648
    %v205 = vmul.f32 %v204, 1.442695
    %v206 = vpow.pop %v205
    %v207 = vadd.f32 %v206, 1.0
    %v208 = vrcp.pop %v207
    %v209 = vmul.f32 1.0, %v208
    %211 = vrot.lane.b32.xlu0 %v203, 32
    %v212 = vpop.permute.xlu0 %211
    %v214 = vmul.f32 %v209, %v212
    %216 = vrot.lane.b32.xlu0 %v214, 64
    %v217 = vpop.permute.xlu0 %216
    %v219 = vadd.f32 %v203, %v217
    %v220 = vtanh.pop %v219
    %v221 = vsub.f32 1.0, %v209
    %223 = vrot.lane.b32.xlu0 %v220, 96
    %v224 = vpop.permute.xlu0 %223
    %v226 = vmul.f32 %v221, %v224
    %v227 = vmul.f32 %v209, 0.0
    %v228 = vadd.f32 %v226, %v227
    %230 = vrot.lane.b32.xlu0 %v228, 96
    %v231 = vpop.permute.xlu0 %230
    %v233 = vrot.slane %v121, 2
    %v235 = vsel %vm129, %v231, 0
    %237 = vmatprep.subr.mxu0 0.0
    %238 = vmatpush1.msra.mxu0 %v20
    %239 = vmatprep.subr.mxu0 0.0
    %240 = vmatpush1.msra.mxu0 %v21
    %241 = vmatprep.subr.mxu0 0.0
    %242 = vmatpush1.msra.mxu0 %v22
    %243 = vmatprep.subr.mxu0 0.0
    %244 = vmatpush1.msra.mxu0 %v23
    %245 = vmatprep.subr.mxu0 0.0
    %246 = vmatpush1.msra.mxu0 0.0
    %247 = vmatprep.subr.mxu0 0.0
    %248 = vmatpush1.msra.mxu0 0.0
    %249 = vmatprep.subr.mxu0 0.0
    %250 = vmatpush1.msra.mxu0 0.0
    %251 = vmatprep.subr.mxu0 0.0
    %252 = vmatpush1.msra.mxu0 0.0
    %253 = vmatprep.subr.mxu0 0.0
    %254 = vmatpush1.msra.mxu0 0.0
    %255 = vmatprep.subr.mxu0 0.0
    %256 = vmatpush1.msra.mxu0 0.0
    %257 = vmatprep.subr.mxu0 0.0
    %258 = vmatpush1.msra.mxu0 0.0
    %259 = vmatprep.subr.mxu0 0.0
    %260 = vmatpush1.msra.mxu0 0.0
    %261 = vmatprep.subr.mxu0 0.0
    %262 = vmatpush1.msra.mxu0 0.0
    %263 = vmatprep.subr.mxu0 0.0
    %264 = vmatpush1.msra.mxu0 0.0
    %265 = vmatprep.subr.mxu0 0.0
    %266 = vmatpush1.msra.mxu0 0.0
    %267 = vmatprep.subr.mxu0 0.0
    %268 = vmatpush1.msra.mxu0 0.0
    %269 = vmatprep.subr.mxu0 0.0
    %270 = vmatpush1.msra.mxu0 0.0
    %271 = vmatprep.subr.mxu0 0.0
    %272 = vmatpush1.msra.mxu0 0.0
    %273 = vmatprep.subr.mxu0 0.0
    %274 = vmatpush1.msra.mxu0 0.0
    %275 = vmatprep.subr.mxu0 0.0
    %276 = vmatpush1.msra.mxu0 0.0
    %277 = vmatprep.subr.mxu0 0.0
    %278 = vmatpush1.msra.mxu0 0.0
    %279 = vmatprep.subr.mxu0 0.0
    %280 = vmatpush1.msra.mxu0 0.0
    %281 = vmatprep.subr.mxu0 0.0
    %282 = vmatpush1.msra.mxu0 0.0
    %283 = vmatprep.subr.mxu0 0.0
    %284 = vmatpush1.msra.mxu0 0.0
    %285 = vmatprep.subr.mxu0 0.0
    %286 = vmatpush1.msra.mxu0 0.0
    %287 = vmatprep.subr.mxu0 0.0
    %288 = vmatpush1.msra.mxu0 0.0
    %289 = vmatprep.subr.mxu0 0.0
    %290 = vmatpush1.msra.mxu0 0.0
    %291 = vmatprep.subr.mxu0 0.0
    %292 = vmatpush1.msra.mxu0 0.0
    %293 = vmatprep.subr.mxu0 0.0
    %294 = vmatpush1.msra.mxu0 0.0
    %295 = vmatprep.subr.mxu0 0.0
    %296 = vmatpush1.msra.mxu0 0.0
    %297 = vmatprep.subr.mxu0 0.0
    %298 = vmatpush1.msra.mxu0 0.0
    %299 = vmatprep.subr.mxu0 0.0
    %300 = vmatpush1.msra.mxu0 0.0
    %301 = vmatprep.mubr.f32.mxu0 0.0
    %302 = vmatmul.mubr.f32.gmra.mrb[0].mxu0 %v235
    %v303 = vpop.f32.mrb[0].mxu0
    %v304 = vadd.f32 %v233, %v303
    %v305 = vpop.f32.mrb[0].mxu0
    %306 = vdwg.mxu0
    %v307 = vadd.f32 %v304, %v36
    %v308 = vxor.u32 %v307, 2147483648
    %v309 = vmul.f32 %v308, 1.442695
    %v310 = vpow.pop %v309
    %v311 = vadd.f32 %v310, 1.0
    %v312 = vrcp.pop %v311
    %v313 = vmul.f32 1.0, %v312
    %315 = vrot.lane.b32.xlu0 %v307, 32
    %v316 = vpop.permute.xlu0 %315
    %v318 = vmul.f32 %v313, %v316
    %320 = vrot.lane.b32.xlu0 %v318, 64
    %v321 = vpop.permute.xlu0 %320
    %v323 = vadd.f32 %v307, %v321
    %v324 = vtanh.pop %v323
    %v325 = vsub.f32 1.0, %v313
    %327 = vrot.lane.b32.xlu0 %v324, 96
    %v328 = vpop.permute.xlu0 %327
    %v330 = vmul.f32 %v325, %v328
    %v331 = vmul.f32 %v313, %v228
    %v332 = vadd.f32 %v330, %v331
    %334 = vrot.lane.b32.xlu0 %v332, 96
    %v335 = vpop.permute.xlu0 %334
    %v336 = vrot.slane %v121, 4
    %v338 = vsel %vm129, %v335, 0
    %340 = vmatprep.subr.mxu0 0.0
    %341 = vmatpush1.msra.mxu0 %v20
    %342 = vmatprep.subr.mxu0 0.0
    %343 = vmatpush1.msra.mxu0 %v21
    %344 = vmatprep.subr.mxu0 0.0
    %345 = vmatpush1.msra.mxu0 %v22
    %346 = vmatprep.subr.mxu0 0.0
    %347 = vmatpush1.msra.mxu0 %v23
    %348 = vmatprep.subr.mxu0 0.0
    %349 = vmatpush1.msra.mxu0 0.0
    %350 = vmatprep.subr.mxu0 0.0
    %351 = vmatpush1.msra.mxu0 0.0
    %352 = vmatprep.subr.mxu0 0.0
    %353 = vmatpush1.msra.mxu0 0.0
    %354 = vmatprep.subr.mxu0 0.0
    %355 = vmatpush1.msra.mxu0 0.0
    %356 = vmatprep.subr.mxu0 0.0
    %357 = vmatpush1.msra.mxu0 0.0
    %358 = vmatprep.subr.mxu0 0.0
    %359 = vmatpush1.msra.mxu0 0.0
    %360 = vmatprep.subr.mxu0 0.0
    %361 = vmatpush1.msra.mxu0 0.0
    %362 = vmatprep.subr.mxu0 0.0
    %363 = vmatpush1.msra.mxu0 0.0
    %364 = vmatprep.subr.mxu0 0.0
    %365 = vmatpush1.msra.mxu0 0.0
    %366 = vmatprep.subr.mxu0 0.0
    %367 = vmatpush1.msra.mxu0 0.0
    %368 = vmatprep.subr.mxu0 0.0
    %369 = vmatpush1.msra.mxu0 0.0
    %370 = vmatprep.subr.mxu0 0.0
    %371 = vmatpush1.msra.mxu0 0.0
    %372 = vmatprep.subr.mxu0 0.0
    %373 = vmatpush1.msra.mxu0 0.0
    %374 = vmatprep.subr.mxu0 0.0
    %375 = vmatpush1.msra.mxu0 0.0
    %376 = vmatprep.subr.mxu0 0.0
    %377 = vmatpush1.msra.mxu0 0.0
    %378 = vmatprep.subr.mxu0 0.0
    %379 = vmatpush1.msra.mxu0 0.0
    %380 = vmatprep.subr.mxu0 0.0
    %381 = vmatpush1.msra.mxu0 0.0
    %382 = vmatprep.subr.mxu0 0.0
    %383 = vmatpush1.msra.mxu0 0.0
    %384 = vmatprep.subr.mxu0 0.0
    %385 = vmatpush1.msra.mxu0 0.0
    %386 = vmatprep.subr.mxu0 0.0
    %387 = vmatpush1.msra.mxu0 0.0
    %388 = vmatprep.subr.mxu0 0.0
    %389 = vmatpush1.msra.mxu0 0.0
    %390 = vmatprep.subr.mxu0 0.0
    %391 = vmatpush1.msra.mxu0 0.0
    %392 = vmatprep.subr.mxu0 0.0
    %393 = vmatpush1.msra.mxu0 0.0
    %394 = vmatprep.subr.mxu0 0.0
    %395 = vmatpush1.msra.mxu0 0.0
    %396 = vmatprep.subr.mxu0 0.0
    %397 = vmatpush1.msra.mxu0 0.0
    %398 = vmatprep.subr.mxu0 0.0
    %399 = vmatpush1.msra.mxu0 0.0
    %400 = vmatprep.subr.mxu0 0.0
    %401 = vmatpush1.msra.mxu0 0.0
    %402 = vmatprep.subr.mxu0 0.0
    %403 = vmatpush1.msra.mxu0 0.0
    %404 = vmatprep.mubr.f32.mxu0 0.0
    %405 = vmatmul.mubr.f32.gmra.mrb[0].mxu0 %v338
    %v406 = vpop.f32.mrb[0].mxu0
    %v407 = vadd.f32 %v336, %v406
    %v408 = vpop.f32.mrb[0].mxu0
    %409 = vdwg.mxu0
    %v410 = vadd.f32 %v407, %v36
    %v411 = vxor.u32 %v410, 2147483648
    %v412 = vmul.f32 %v411, 1.442695
    %v413 = vpow.pop %v412
    %v414 = vadd.f32 %v413, 1.0
    %v415 = vrcp.pop %v414
    %v416 = vmul.f32 1.0, %v415
    %418 = vrot.lane.b32.xlu0 %v410, 32
    %v419 = vpop.permute.xlu0 %418
    %v421 = vmul.f32 %v416, %v419
    %423 = vrot.lane.b32.xlu0 %v421, 64
    %v424 = vpop.permute.xlu0 %423
    %v426 = vadd.f32 %v410, %v424
    %v427 = vtanh.pop %v426
    %v428 = vsub.f32 1.0, %v416
    %430 = vrot.lane.b32.xlu0 %v427, 96
    %v431 = vpop.permute.xlu0 %430
    %v433 = vmul.f32 %v428, %v431
    %v434 = vmul.f32 %v416, %v332
    %v435 = vadd.f32 %v433, %v434
    %437 = vrot.lane.b32.xlu0 %v435, 96
    %v438 = vpop.permute.xlu0 %437
    %v439 = vrot.slane %v121, 6
    %v441 = vsel %vm129, %v438, 0
    %443 = vmatprep.subr.mxu0 0.0
    %444 = vmatpush1.msra.mxu0 %v20
    %445 = vmatprep.subr.mxu0 0.0
    %446 = vmatpush1.msra.mxu0 %v21
    %447 = vmatprep.subr.mxu0 0.0
    %448 = vmatpush1.msra.mxu0 %v22
    %449 = vmatprep.subr.mxu0 0.0
    %450 = vmatpush1.msra.mxu0 %v23
    %451 = vmatprep.subr.mxu0 0.0
    %452 = vmatpush1.msra.mxu0 0.0
    %453 = vmatprep.subr.mxu0 0.0
    %454 = vmatpush1.msra.mxu0 0.0
    %455 = vmatprep.subr.mxu0 0.0
    %456 = vmatpush1.msra.mxu0 0.0
    %457 = vmatprep.subr.mxu0 0.0
    %458 = vmatpush1.msra.mxu0 0.0
    %459 = vmatprep.subr.mxu0 0.0
    %460 = vmatpush1.msra.mxu0 0.0
    %461 = vmatprep.subr.mxu0 0.0
    %462 = vmatpush1.msra.mxu0 0.0
    %463 = vmatprep.subr.mxu0 0.0
    %464 = vmatpush1.msra.mxu0 0.0
    %465 = vmatprep.subr.mxu0 0.0
    %466 = vmatpush1.msra.mxu0 0.0
    %467 = vmatprep.subr.mxu0 0.0
    %468 = vmatpush1.msra.mxu0 0.0
    %469 = vmatprep.subr.mxu0 0.0
    %470 = vmatpush1.msra.mxu0 0.0
    %471 = vmatprep.subr.mxu0 0.0
    %472 = vmatpush1.msra.mxu0 0.0
    %473 = vmatprep.subr.mxu0 0.0
    %474 = vmatpush1.msra.mxu0 0.0
    %475 = vmatprep.subr.mxu0 0.0
    %476 = vmatpush1.msra.mxu0 0.0
    %477 = vmatprep.subr.mxu0 0.0
    %478 = vmatpush1.msra.mxu0 0.0
    %479 = vmatprep.subr.mxu0 0.0
    %480 = vmatpush1.msra.mxu0 0.0
    %481 = vmatprep.subr.mxu0 0.0
    %482 = vmatpush1.msra.mxu0 0.0
    %483 = vmatprep.subr.mxu0 0.0
    %484 = vmatpush1.msra.mxu0 0.0
    %485 = vmatprep.subr.mxu0 0.0
    %486 = vmatpush1.msra.mxu0 0.0
    %487 = vmatprep.subr.mxu0 0.0
    %488 = vmatpush1.msra.mxu0 0.0
    %489 = vmatprep.subr.mxu0 0.0
    %490 = vmatpush1.msra.mxu0 0.0
    %491 = vmatprep.subr.mxu0 0.0
    %492 = vmatpush1.msra.mxu0 0.0
    %493 = vmatprep.subr.mxu0 0.0
    %494 = vmatpush1.msra.mxu0 0.0
    %495 = vmatprep.subr.mxu0 0.0
    %496 = vmatpush1.msra.mxu0 0.0
    %497 = vmatprep.subr.mxu0 0.0
    %498 = vmatpush1.msra.mxu0 0.0
    %499 = vmatprep.subr.mxu0 0.0
    %500 = vmatpush1.msra.mxu0 0.0
    %501 = vmatprep.subr.mxu0 0.0
    %502 = vmatpush1.msra.mxu0 0.0
    %503 = vmatprep.subr.mxu0 0.0
    %504 = vmatpush1.msra.mxu0 0.0
    %505 = vmatprep.subr.mxu0 0.0
    %506 = vmatpush1.msra.mxu0 0.0
    %507 = vmatprep.mubr.f32.mxu0 0.0
    %508 = vmatmul.mubr.f32.gmra.mrb[0].mxu0 %v441
    %v509 = vpop.f32.mrb[0].mxu0
    %v510 = vadd.f32 %v439, %v509
    %v511 = vpop.f32.mrb[0].mxu0
    %512 = vdwg.mxu0
    %v513 = vadd.f32 %v510, %v36
    %v514 = vxor.u32 %v513, 2147483648
    %v515 = vmul.f32 %v514, 1.442695
    %v516 = vpow.pop %v515
    %v517 = vadd.f32 %v516, 1.0
    %v518 = vrcp.pop %v517
    %v519 = vmul.f32 1.0, %v518
    %521 = vrot.lane.b32.xlu0 %v513, 32
    %v522 = vpop.permute.xlu0 %521
    %v524 = vmul.f32 %v519, %v522
    %526 = vrot.lane.b32.xlu0 %v524, 64
    %v527 = vpop.permute.xlu0 %526
    %v529 = vadd.f32 %v513, %v527
    %v530 = vtanh.pop %v529
    %v531 = vsub.f32 1.0, %v519
    %533 = vrot.lane.b32.xlu0 %v530, 96
    %v534 = vpop.permute.xlu0 %533
    %v536 = vmul.f32 %v531, %v534
    %v537 = vmul.f32 %v519, %v435
    %v538 = vadd.f32 %v536, %v537
    %540 = vrot.lane.b32.xlu0 %v538, 96
    %v541 = vpop.permute.xlu0 %540
    %v542 = vsel %vm129, %v541, 0
    %544 = vmatprep.subr.mxu0 0.0
    %545 = vmatpush1.msra.mxu0 %v20
    %546 = vmatprep.subr.mxu0 0.0
    %547 = vmatpush1.msra.mxu0 %v21
    %548 = vmatprep.subr.mxu0 0.0
    %549 = vmatpush1.msra.mxu0 %v22
    %550 = vmatprep.subr.mxu0 0.0
    %551 = vmatpush1.msra.mxu0 %v23
    %552 = vmatprep.subr.mxu0 0.0
    %553 = vmatpush1.msra.mxu0 0.0
    %554 = vmatprep.subr.mxu0 0.0
    %555 = vmatpush1.msra.mxu0 0.0
    %556 = vmatprep.subr.mxu0 0.0
    %557 = vmatpush1.msra.mxu0 0.0
    %558 = vmatprep.subr.mxu0 0.0
    %559 = vmatpush1.msra.mxu0 0.0
    %560 = vmatprep.subr.mxu0 0.0
    %561 = vmatpush1.msra.mxu0 0.0
    %562 = vmatprep.subr.mxu0 0.0
    %563 = vmatpush1.msra.mxu0 0.0
    %564 = vmatprep.subr.mxu0 0.0
    %565 = vmatpush1.msra.mxu0 0.0
    %566 = vmatprep.subr.mxu0 0.0
    %567 = vmatpush1.msra.mxu0 0.0
    %568 = vmatprep.subr.mxu0 0.0
    %569 = vmatpush1.msra.mxu0 0.0
    %570 = vmatprep.subr.mxu0 0.0
    %571 = vmatpush1.msra.mxu0 0.0
    %572 = vmatprep.subr.mxu0 0.0
    %573 = vmatpush1.msra.mxu0 0.0
    %574 = vmatprep.subr.mxu0 0.0
    %575 = vmatpush1.msra.mxu0 0.0
    %576 = vmatprep.subr.mxu0 0.0
    %577 = vmatpush1.msra.mxu0 0.0
    %578 = vmatprep.subr.mxu0 0.0
    %579 = vmatpush1.msra.mxu0 0.0
    %580 = vmatprep.subr.mxu0 0.0
    %581 = vmatpush1.msra.mxu0 0.0
    %582 = vmatprep.subr.mxu0 0.0
    %583 = vmatpush1.msra.mxu0 0.0
    %584 = vmatprep.subr.mxu0 0.0
    %585 = vmatpush1.msra.mxu0 0.0
    %586 = vmatprep.subr.mxu0 0.0
    %587 = vmatpush1.msra.mxu0 0.0
    %588 = vmatprep.subr.mxu0 0.0
    %589 = vmatpush1.msra.mxu0 0.0
    %590 = vmatprep.subr.mxu0 0.0
    %591 = vmatpush1.msra.mxu0 0.0
    %592 = vmatprep.subr.mxu0 0.0
    %593 = vmatpush1.msra.mxu0 0.0
    %594 = vmatprep.subr.mxu0 0.0
    %595 = vmatpush1.msra.mxu0 0.0
    %596 = vmatprep.subr.mxu0 0.0
    %597 = vmatpush1.msra.mxu0 0.0
    %598 = vmatprep.subr.mxu0 0.0
    %599 = vmatpush1.msra.mxu0 0.0
    %600 = vmatprep.subr.mxu0 0.0
    %601 = vmatpush1.msra.mxu0 0.0
    %602 = vmatprep.subr.mxu0 0.0
    %603 = vmatpush1.msra.mxu0 0.0
    %604 = vmatprep.subr.mxu0 0.0
    %605 = vmatpush1.msra.mxu0 0.0
    %606 = vmatprep.subr.mxu0 0.0
    %607 = vmatpush1.msra.mxu0 0.0
    %608 = vmatprep.mubr.f32.mxu0 0.0
    %609 = vmatmul.mubr.f32.gmra.mrb[0].mxu0 %v542
    %v610 = vpop.f32.mrb[0].mxu0
    %v611 = vadd.f32 %v126, %v610
    %v612 = vpop.f32.mrb[0].mxu0
    %613 = vdwg.mxu0
    %v614 = vadd.f32 %v611, %v36
    %v615 = vxor.u32 %v614, 2147483648
    %v616 = vmul.f32 %v615, 1.442695
    %v617 = vpow.pop %v616
    %v618 = vadd.f32 %v617, 1.0
    %v619 = vrcp.pop %v618
    %v620 = vmul.f32 1.0, %v619
    %622 = vrot.lane.b32.xlu0 %v614, 32
    %v623 = vpop.permute.xlu0 %622
    %v625 = vmul.f32 %v620, %v623
    %627 = vrot.lane.b32.xlu0 %v625, 64
    %v628 = vpop.permute.xlu0 %627
    %v630 = vadd.f32 %v614, %v628
    %v631 = vtanh.pop %v630
    %v632 = vsub.f32 1.0, %v620
    %634 = vrot.lane.b32.xlu0 %v631, 96
    %v635 = vpop.permute.xlu0 %634
    %v637 = vmul.f32 %v632, %v635
    %v638 = vmul.f32 %v620, %v538
    %v639 = vadd.f32 %v637, %v638
    %641 = vrot.lane.b32.xlu0 %v639, 96
    %v642 = vpop.permute.xlu0 %641
    %v644 = vrot.slane %v126, 2
    %v646 = vsel %vm129, %v642, 0
    %648 = vmatprep.subr.mxu0 0.0
    %649 = vmatpush1.msra.mxu0 %v20
    %650 = vmatprep.subr.mxu0 0.0
    %651 = vmatpush1.msra.mxu0 %v21
    %652 = vmatprep.subr.mxu0 0.0
    %653 = vmatpush1.msra.mxu0 %v22
    %654 = vmatprep.subr.mxu0 0.0
    %655 = vmatpush1.msra.mxu0 %v23
    %656 = vmatprep.subr.mxu0 0.0
    %657 = vmatpush1.msra.mxu0 0.0
    %658 = vmatprep.subr.mxu0 0.0
    %659 = vmatpush1.msra.mxu0 0.0
    %660 = vmatprep.subr.mxu0 0.0
    %661 = vmatpush1.msra.mxu0 0.0
    %662 = vmatprep.subr.mxu0 0.0
    %663 = vmatpush1.msra.mxu0 0.0
    %664 = vmatprep.subr.mxu0 0.0
    %665 = vmatpush1.msra.mxu0 0.0
    %666 = vmatprep.subr.mxu0 0.0
    %667 = vmatpush1.msra.mxu0 0.0
    %668 = vmatprep.subr.mxu0 0.0
    %669 = vmatpush1.msra.mxu0 0.0
    %670 = vmatprep.subr.mxu0 0.0
    %671 = vmatpush1.msra.mxu0 0.0
    %672 = vmatprep.subr.mxu0 0.0
    %673 = vmatpush1.msra.mxu0 0.0
    %674 = vmatprep.subr.mxu0 0.0
    %675 = vmatpush1.msra.mxu0 0.0
    %676 = vmatprep.subr.mxu0 0.0
    %677 = vmatpush1.msra.mxu0 0.0
    %678 = vmatprep.subr.mxu0 0.0
    %679 = vmatpush1.msra.mxu0 0.0
    %680 = vmatprep.subr.mxu0 0.0
    %681 = vmatpush1.msra.mxu0 0.0
    %682 = vmatprep.subr.mxu0 0.0
    %683 = vmatpush1.msra.mxu0 0.0
    %684 = vmatprep.subr.mxu0 0.0
    %685 = vmatpush1.msra.mxu0 0.0
    %686 = vmatprep.subr.mxu0 0.0
    %687 = vmatpush1.msra.mxu0 0.0
    %688 = vmatprep.subr.mxu0 0.0
    %689 = vmatpush1.msra.mxu0 0.0
    %690 = vmatprep.subr.mxu0 0.0
    %691 = vmatpush1.msra.mxu0 0.0
    %692 = vmatprep.subr.mxu0 0.0
    %693 = vmatpush1.msra.mxu0 0.0
    %694 = vmatprep.subr.mxu0 0.0
    %695 = vmatpush1.msra.mxu0 0.0
    %696 = vmatprep.subr.mxu0 0.0
    %697 = vmatpush1.msra.mxu0 0.0
    %698 = vmatprep.subr.mxu0 0.0
    %699 = vmatpush1.msra.mxu0 0.0
    %700 = vmatprep.subr.mxu0 0.0
    %701 = vmatpush1.msra.mxu0 0.0
    %702 = vmatprep.subr.mxu0 0.0
    %703 = vmatpush1.msra.mxu0 0.0
    %704 = vmatprep.subr.mxu0 0.0
    %705 = vmatpush1.msra.mxu0 0.0
    %706 = vmatprep.subr.mxu0 0.0
    %707 = vmatpush1.msra.mxu0 0.0
    %708 = vmatprep.subr.mxu0 0.0
    %709 = vmatpush1.msra.mxu0 0.0
    %710 = vmatprep.subr.mxu0 0.0
    %711 = vmatpush1.msra.mxu0 0.0
    %712 = vmatprep.mubr.f32.mxu0 0.0
    %713 = vmatmul.mubr.f32.gmra.mrb[0].mxu0 %v646
    %v714 = vpop.f32.mrb[0].mxu0
    %v715 = vadd.f32 %v644, %v714
    %v716 = vpop.f32.mrb[0].mxu0
    %717 = vdwg.mxu0
    %v718 = vadd.f32 %v715, %v36
    %v719 = vxor.u32 %v718, 2147483648
    %v720 = vmul.f32 %v719, 1.442695
    %v721 = vpow.pop %v720
    %v722 = vadd.f32 %v721, 1.0
    %v723 = vrcp.pop %v722
    %v724 = vmul.f32 1.0, %v723
    %726 = vrot.lane.b32.xlu0 %v718, 32
    %v727 = vpop.permute.xlu0 %726
    %v729 = vmul.f32 %v724, %v727
    %731 = vrot.lane.b32.xlu0 %v729, 64
    %v732 = vpop.permute.xlu0 %731
    %v734 = vadd.f32 %v718, %v732
    %v735 = vtanh.pop %v734
    %v736 = vsub.f32 1.0, %v724
    %738 = vrot.lane.b32.xlu0 %v735, 96
    %v739 = vpop.permute.xlu0 %738
    %v741 = vmul.f32 %v736, %v739
    %v742 = vmul.f32 %v724, %v639
    %v743 = vadd.f32 %v741, %v742
    %745 = vrot.lane.b32.xlu0 %v743, 96
    %v746 = vpop.permute.xlu0 %745
    %v747 = vrot.slane %v126, 4
    %v749 = vsel %vm129, %v746, 0
    %751 = vmatprep.subr.mxu0 0.0
    %752 = vmatpush1.msra.mxu0 %v20
    %753 = vmatprep.subr.mxu0 0.0
    %754 = vmatpush1.msra.mxu0 %v21
    %755 = vmatprep.subr.mxu0 0.0
    %756 = vmatpush1.msra.mxu0 %v22
    %757 = vmatprep.subr.mxu0 0.0
    %758 = vmatpush1.msra.mxu0 %v23
    %759 = vmatprep.subr.mxu0 0.0
    %760 = vmatpush1.msra.mxu0 0.0
    %761 = vmatprep.subr.mxu0 0.0
    %762 = vmatpush1.msra.mxu0 0.0
    %763 = vmatprep.subr.mxu0 0.0
    %764 = vmatpush1.msra.mxu0 0.0
    %765 = vmatprep.subr.mxu0 0.0
    %766 = vmatpush1.msra.mxu0 0.0
    %767 = vmatprep.subr.mxu0 0.0
    %768 = vmatpush1.msra.mxu0 0.0
    %769 = vmatprep.subr.mxu0 0.0
    %770 = vmatpush1.msra.mxu0 0.0
    %771 = vmatprep.subr.mxu0 0.0
    %772 = vmatpush1.msra.mxu0 0.0
    %773 = vmatprep.subr.mxu0 0.0
    %774 = vmatpush1.msra.mxu0 0.0
    %775 = vmatprep.subr.mxu0 0.0
    %776 = vmatpush1.msra.mxu0 0.0
    %777 = vmatprep.subr.mxu0 0.0
    %778 = vmatpush1.msra.mxu0 0.0
    %779 = vmatprep.subr.mxu0 0.0
    %780 = vmatpush1.msra.mxu0 0.0
    %781 = vmatprep.subr.mxu0 0.0
    %782 = vmatpush1.msra.mxu0 0.0
    %783 = vmatprep.subr.mxu0 0.0
    %784 = vmatpush1.msra.mxu0 0.0
    %785 = vmatprep.subr.mxu0 0.0
    %786 = vmatpush1.msra.mxu0 0.0
    %787 = vmatprep.subr.mxu0 0.0
    %788 = vmatpush1.msra.mxu0 0.0
    %789 = vmatprep.subr.mxu0 0.0
    %790 = vmatpush1.msra.mxu0 0.0
    %791 = vmatprep.subr.mxu0 0.0
    %792 = vmatpush1.msra.mxu0 0.0
    %793 = vmatprep.subr.mxu0 0.0
    %794 = vmatpush1.msra.mxu0 0.0
    %795 = vmatprep.subr.mxu0 0.0
    %796 = vmatpush1.msra.mxu0 0.0
    %797 = vmatprep.subr.mxu0 0.0
    %798 = vmatpush1.msra.mxu0 0.0
    %799 = vmatprep.subr.mxu0 0.0
    %800 = vmatpush1.msra.mxu0 0.0
    %801 = vmatprep.subr.mxu0 0.0
    %802 = vmatpush1.msra.mxu0 0.0
    %803 = vmatprep.subr.mxu0 0.0
    %804 = vmatpush1.msra.mxu0 0.0
    %805 = vmatprep.subr.mxu0 0.0
    %806 = vmatpush1.msra.mxu0 0.0
    %807 = vmatprep.subr.mxu0 0.0
    %808 = vmatpush1.msra.mxu0 0.0
    %809 = vmatprep.subr.mxu0 0.0
    %810 = vmatpush1.msra.mxu0 0.0
    %811 = vmatprep.subr.mxu0 0.0
    %812 = vmatpush1.msra.mxu0 0.0
    %813 = vmatprep.subr.mxu0 0.0
    %814 = vmatpush1.msra.mxu0 0.0
    %815 = vmatprep.mubr.f32.mxu0 0.0
    %816 = vmatmul.mubr.f32.gmra.mrb[0].mxu0 %v749
    %v817 = vpop.f32.mrb[0].mxu0
    %v818 = vadd.f32 %v747, %v817
    %v819 = vpop.f32.mrb[0].mxu0
    %820 = vdwg.mxu0
    %v821 = vadd.f32 %v818, %v36
    %v822 = vxor.u32 %v821, 2147483648
    %v823 = vmul.f32 %v822, 1.442695
    %v824 = vpow.pop %v823
    %v825 = vadd.f32 %v824, 1.0
    %v826 = vrcp.pop %v825
    %v827 = vmul.f32 1.0, %v826
    %829 = vrot.lane.b32.xlu0 %v821, 32
    %v830 = vpop.permute.xlu0 %829
    %v832 = vmul.f32 %v827, %v830
    %834 = vrot.lane.b32.xlu0 %v832, 64
    %v835 = vpop.permute.xlu0 %834
    %v837 = vadd.f32 %v821, %v835
    %v838 = vtanh.pop %v837
    %v839 = vsub.f32 1.0, %v827
    %841 = vrot.lane.b32.xlu0 %v838, 96
    %v842 = vpop.permute.xlu0 %841
    %v844 = vmul.f32 %v839, %v842
    %v845 = vmul.f32 %v827, %v743
    %v846 = vadd.f32 %v844, %v845
    %848 = vrot.lane.b32.xlu0 %v846, 96
    %v849 = vpop.permute.xlu0 %848
    %v850 = vrot.slane %v126, 6
    %v852 = vsel %vm129, %v849, 0
    %854 = vmatprep.subr.mxu0 0.0
    %855 = vmatpush1.msra.mxu0 %v20
    %856 = vmatprep.subr.mxu0 0.0
    %857 = vmatpush1.msra.mxu0 %v21
    %858 = vmatprep.subr.mxu0 0.0
    %859 = vmatpush1.msra.mxu0 %v22
    %860 = vmatprep.subr.mxu0 0.0
    %861 = vmatpush1.msra.mxu0 %v23
    %862 = vmatprep.subr.mxu0 0.0
    %863 = vmatpush1.msra.mxu0 0.0
    %864 = vmatprep.subr.mxu0 0.0
    %865 = vmatpush1.msra.mxu0 0.0
    %866 = vmatprep.subr.mxu0 0.0
    %867 = vmatpush1.msra.mxu0 0.0
    %868 = vmatprep.subr.mxu0 0.0
    %869 = vmatpush1.msra.mxu0 0.0
    %870 = vmatprep.subr.mxu0 0.0
    %871 = vmatpush1.msra.mxu0 0.0
    %872 = vmatprep.subr.mxu0 0.0
    %873 = vmatpush1.msra.mxu0 0.0
    %874 = vmatprep.subr.mxu0 0.0
    %875 = vmatpush1.msra.mxu0 0.0
    %876 = vmatprep.subr.mxu0 0.0
    %877 = vmatpush1.msra.mxu0 0.0
    %878 = vmatprep.subr.mxu0 0.0
    %879 = vmatpush1.msra.mxu0 0.0
    %880 = vmatprep.subr.mxu0 0.0
    %881 = vmatpush1.msra.mxu0 0.0
    %882 = vmatprep.subr.mxu0 0.0
    %883 = vmatpush1.msra.mxu0 0.0
    %884 = vmatprep.subr.mxu0 0.0
    %885 = vmatpush1.msra.mxu0 0.0
    %886 = vmatprep.subr.mxu0 0.0
    %887 = vmatpush1.msra.mxu0 0.0
    %888 = vmatprep.subr.mxu0 0.0
    %889 = vmatpush1.msra.mxu0 0.0
    %890 = vmatprep.subr.mxu0 0.0
    %891 = vmatpush1.msra.mxu0 0.0
    %892 = vmatprep.subr.mxu0 0.0
    %893 = vmatpush1.msra.mxu0 0.0
    %894 = vmatprep.subr.mxu0 0.0
    %895 = vmatpush1.msra.mxu0 0.0
    %896 = vmatprep.subr.mxu0 0.0
    %897 = vmatpush1.msra.mxu0 0.0
    %898 = vmatprep.subr.mxu0 0.0
    %899 = vmatpush1.msra.mxu0 0.0
    %900 = vmatprep.subr.mxu0 0.0
    %901 = vmatpush1.msra.mxu0 0.0
    %902 = vmatprep.subr.mxu0 0.0
    %903 = vmatpush1.msra.mxu0 0.0
    %904 = vmatprep.subr.mxu0 0.0
    %905 = vmatpush1.msra.mxu0 0.0
    %906 = vmatprep.subr.mxu0 0.0
    %907 = vmatpush1.msra.mxu0 0.0
    %908 = vmatprep.subr.mxu0 0.0
    %909 = vmatpush1.msra.mxu0 0.0
    %910 = vmatprep.subr.mxu0 0.0
    %911 = vmatpush1.msra.mxu0 0.0
    %912 = vmatprep.subr.mxu0 0.0
    %913 = vmatpush1.msra.mxu0 0.0
    %914 = vmatprep.subr.mxu0 0.0
    %915 = vmatpush1.msra.mxu0 0.0
    %916 = vmatprep.subr.mxu0 0.0
    %917 = vmatpush1.msra.mxu0 0.0
    %918 = vmatprep.mubr.f32.mxu0 0.0
    %919 = vmatmul.mubr.f32.gmra.mrb[0].mxu0 %v852
    %v920 = vpop.f32.mrb[0].mxu0
    %v921 = vadd.f32 %v850, %v920
    %v922 = vpop.f32.mrb[0].mxu0
    %923 = vdwg.mxu0
    %v924 = vadd.f32 %v921, %v36
    %v925 = vxor.u32 %v924, 2147483648
    %v926 = vmul.f32 %v925, 1.442695
    %v927 = vpow.pop %v926
    %v928 = vadd.f32 %v927, 1.0
    %v929 = vrcp.pop %v928
    %v930 = vmul.f32 1.0, %v929
    %932 = vrot.lane.b32.xlu0 %v924, 32
    %v933 = vpop.permute.xlu0 %932
    %v935 = vmul.f32 %v930, %v933
    %937 = vrot.lane.b32.xlu0 %v935, 64
    %v938 = vpop.permute.xlu0 %937
    %v940 = vadd.f32 %v924, %v938
    %v941 = vtanh.pop %v940
    %v942 = vsub.f32 1.0, %v930
    %944 = vrot.lane.b32.xlu0 %v941, 96
    %v945 = vpop.permute.xlu0 %944
    %v947 = vmul.f32 %v942, %v945
    %v948 = vmul.f32 %v930, %v846
    %v949 = vadd.f32 %v947, %v948
    %v950 = vld [vmem:[%s1] sm:$0x3]
    %952 = vrot.lane.b32.xlu0 %v949, 96
    %v953 = vpop.permute.xlu0 %952
    %v954 = vsel %vm129, %v953, 0
    %956 = vmatprep.subr.mxu0 0.0
    %957 = vmatpush1.msra.mxu0 %v27
    %958 = vmatprep.subr.mxu0 0.0
    %959 = vmatpush1.msra.mxu0 %v28
    %960 = vmatprep.subr.mxu0 0.0
    %961 = vmatpush1.msra.mxu0 %v29
    %962 = vmatprep.subr.mxu0 0.0
    %963 = vmatpush1.msra.mxu0 %v30
    %964 = vmatprep.subr.mxu0 0.0
    %965 = vmatpush1.msra.mxu0 0.0
    %966 = vmatprep.subr.mxu0 0.0
    %967 = vmatpush1.msra.mxu0 0.0
    %968 = vmatprep.subr.mxu0 0.0
    %969 = vmatpush1.msra.mxu0 0.0
    %970 = vmatprep.subr.mxu0 0.0
    %971 = vmatpush1.msra.mxu0 0.0
    %972 = vmatprep.subr.mxu0 0.0
    %973 = vmatpush1.msra.mxu0 0.0
    %974 = vmatprep.subr.mxu0 0.0
    %975 = vmatpush1.msra.mxu0 0.0
    %976 = vmatprep.subr.mxu0 0.0
    %977 = vmatpush1.msra.mxu0 0.0
    %978 = vmatprep.subr.mxu0 0.0
    %979 = vmatpush1.msra.mxu0 0.0
    %980 = vmatprep.subr.mxu0 0.0
    %981 = vmatpush1.msra.mxu0 0.0
    %982 = vmatprep.subr.mxu0 0.0
    %983 = vmatpush1.msra.mxu0 0.0
    %984 = vmatprep.subr.mxu0 0.0
    %985 = vmatpush1.msra.mxu0 0.0
    %986 = vmatprep.subr.mxu0 0.0
    %987 = vmatpush1.msra.mxu0 0.0
    %988 = vmatprep.subr.mxu0 0.0
    %989 = vmatpush1.msra.mxu0 0.0
    %990 = vmatprep.subr.mxu0 0.0
    %991 = vmatpush1.msra.mxu0 0.0
    %992 = vmatprep.subr.mxu0 0.0
    %993 = vmatpush1.msra.mxu0 0.0
    %994 = vmatprep.subr.mxu0 0.0
    %995 = vmatpush1.msra.mxu0 0.0
    %996 = vmatprep.subr.mxu0 0.0
    %997 = vmatpush1.msra.mxu0 0.0
    %998 = vmatprep.subr.mxu0 0.0
    %999 = vmatpush1.msra.mxu0 0.0
    %1000 = vmatprep.subr.mxu0 0.0
    %1001 = vmatpush1.msra.mxu0 0.0
    %1002 = vmatprep.subr.mxu0 0.0
    %1003 = vmatpush1.msra.mxu0 0.0
    %1004 = vmatprep.subr.mxu0 0.0
    %1005 = vmatpush1.msra.mxu0 0.0
    %1006 = vmatprep.subr.mxu0 0.0
    %1007 = vmatpush1.msra.mxu0 0.0
    %1008 = vmatprep.subr.mxu0 0.0
    %1009 = vmatpush1.msra.mxu0 0.0
    %1010 = vmatprep.subr.mxu0 0.0
    %1011 = vmatpush1.msra.mxu0 0.0
    %1012 = vmatprep.subr.mxu0 0.0
    %1013 = vmatpush1.msra.mxu0 0.0
    %1014 = vmatprep.subr.mxu0 0.0
    %1015 = vmatpush1.msra.mxu0 0.0
    %1016 = vmatprep.subr.mxu0 0.0
    %1017 = vmatpush1.msra.mxu0 0.0
    %1018 = vmatprep.subr.mxu0 0.0
    %1019 = vmatpush1.msra.mxu0 0.0
    %1020 = vmatprep.mubr.f32.mxu0 0.0
    %1021 = vmatmul.mubr.f32.gmra.mrb[0].mxu0 %v954
    %v1022 = vpop.f32.mrb[0].mxu0
    %v1023 = vadd.f32 0.0, %v1022
    %v1024 = vpop.f32.mrb[0].mxu0
    %1025 = vdwg.mxu0
    %v1027 = vsel %vm43, %v950, 0
    %v1030 = vsel %vm50, %v25, 0
    %1032 = vmatprep.subr.mxu0 0.0
    %1033 = vmatpush1.msra.mxu0 %v1030
    %1034 = vmatprep.subr.mxu0 0.0
    %1035 = vmatpush1.msra.mxu0 0.0
    %1036 = vmatprep.subr.mxu0 0.0
    %1037 = vmatpush1.msra.mxu0 0.0
    %1038 = vmatprep.subr.mxu0 0.0
    %1039 = vmatpush1.msra.mxu0 0.0
    %1040 = vmatprep.subr.mxu0 0.0
    %1041 = vmatpush1.msra.mxu0 0.0
    %1042 = vmatprep.subr.mxu0 0.0
    %1043 = vmatpush1.msra.mxu0 0.0
    %1044 = vmatprep.subr.mxu0 0.0
    %1045 = vmatpush1.msra.mxu0 0.0
    %1046 = vmatprep.subr.mxu0 0.0
    %1047 = vmatpush1.msra.mxu0 0.0
    %1048 = vmatprep.subr.mxu0 0.0
    %1049 = vmatpush1.msra.mxu0 0.0
    %1050 = vmatprep.subr.mxu0 0.0
    %1051 = vmatpush1.msra.mxu0 0.0
    %1052 = vmatprep.subr.mxu0 0.0
    %1053 = vmatpush1.msra.mxu0 0.0
    %1054 = vmatprep.subr.mxu0 0.0
    %1055 = vmatpush1.msra.mxu0 0.0
    %1056 = vmatprep.subr.mxu0 0.0
    %1057 = vmatpush1.msra.mxu0 0.0
    %1058 = vmatprep.subr.mxu0 0.0
    %1059 = vmatpush1.msra.mxu0 0.0
    %1060 = vmatprep.subr.mxu0 0.0
    %1061 = vmatpush1.msra.mxu0 0.0
    %1062 = vmatprep.subr.mxu0 0.0
    %1063 = vmatpush1.msra.mxu0 0.0
    %1064 = vmatprep.subr.mxu0 0.0
    %1065 = vmatpush1.msra.mxu0 0.0
    %1066 = vmatprep.subr.mxu0 0.0
    %1067 = vmatpush1.msra.mxu0 0.0
    %1068 = vmatprep.subr.mxu0 0.0
    %1069 = vmatpush1.msra.mxu0 0.0
    %1070 = vmatprep.subr.mxu0 0.0
    %1071 = vmatpush1.msra.mxu0 0.0
    %1072 = vmatprep.subr.mxu0 0.0
    %1073 = vmatpush1.msra.mxu0 0.0
    %1074 = vmatprep.subr.mxu0 0.0
    %1075 = vmatpush1.msra.mxu0 0.0
    %1076 = vmatprep.subr.mxu0 0.0
    %1077 = vmatpush1.msra.mxu0 0.0
    %1078 = vmatprep.subr.mxu0 0.0
    %1079 = vmatpush1.msra.mxu0 0.0
    %1080 = vmatprep.subr.mxu0 0.0
    %1081 = vmatpush1.msra.mxu0 0.0
    %1082 = vmatprep.subr.mxu0 0.0
    %1083 = vmatpush1.msra.mxu0 0.0
    %1084 = vmatprep.subr.mxu0 0.0
    %1085 = vmatpush1.msra.mxu0 0.0
    %1086 = vmatprep.subr.mxu0 0.0
    %1087 = vmatpush1.msra.mxu0 0.0
    %1088 = vmatprep.subr.mxu0 0.0
    %1089 = vmatpush1.msra.mxu0 0.0
    %1090 = vmatprep.subr.mxu0 0.0
    %1091 = vmatpush1.msra.mxu0 0.0
    %1092 = vmatprep.subr.mxu0 0.0
    %1093 = vmatpush1.msra.mxu0 0.0
    %1094 = vmatprep.subr.mxu0 0.0
    %1095 = vmatpush1.msra.mxu0 0.0
    %1096 = vmatprep.mubr.f32.mxu0 0.0
    %1097 = vmatmul.mubr.f32.gmra.mrb[0].mxu0 %v1027
    %v1098 = vpop.f32.mrb[0].mxu0
    %v1099 = vadd.f32 %v1023, %v1098
    %v1100 = vpop.f32.mrb[0].mxu0
    %1101 = vdwg.mxu0
    %v1102 = vadd.f32 %v1099, %v38
    %v1103 = vxor.u32 %v1102, 2147483648
    %v1104 = vmul.f32 %v1103, 1.442695
    %v1105 = vpow.pop %v1104
    %v1106 = vadd.f32 %v1105, 1.0
    %v1107 = vrcp.pop %v1106
    %v1108 = vmul.f32 1.0, %v1107
    %1110 = vrot.lane.b32.xlu0 %v1102, 32
    %v1111 = vpop.permute.xlu0 %1110
    %v1113 = vmul.f32 %v1108, %v1111
    %1115 = vrot.lane.b32.xlu0 %v1113, 64
    %v1116 = vpop.permute.xlu0 %1115
    %v1118 = vadd.f32 %v1102, %v1116
    %v1119 = vtanh.pop %v1118
    %v1120 = vsub.f32 1.0, %v1108
    %1122 = vrot.lane.b32.xlu0 %v1119, 96
    %v1123 = vpop.permute.xlu0 %1122
    %v1125 = vmul.f32 %v1120, %v1123
    %v1126 = vmul.f32 %v1108, %v949
    %v1127 = vadd.f32 %v1125, %v1126
    %1129 = vrot.lane.b32.xlu0 %v1127, 96
    %v1130 = vpop.permute.xlu0 %1129
    %v1131 = vsel %vm129, %v1130, 0
    %1133 = vmatprep.subr.mxu0 0.0
    %1134 = vmatpush1.msra.mxu0 %v32
    %1135 = vmatprep.subr.mxu0 0.0
    %1136 = vmatpush1.msra.mxu0 %v33
    %1137 = vmatprep.subr.mxu0 0.0
    %1138 = vmatpush1.msra.mxu0 %v34
    %1139 = vmatprep.subr.mxu0 0.0
    %1140 = vmatpush1.msra.mxu0 %v35
    %1141 = vmatprep.subr.mxu0 0.0
    %1142 = vmatpush1.msra.mxu0 0.0
    %1143 = vmatprep.subr.mxu0 0.0
    %1144 = vmatpush1.msra.mxu0 0.0
    %1145 = vmatprep.subr.mxu0 0.0
    %1146 = vmatpush1.msra.mxu0 0.0
    %1147 = vmatprep.subr.mxu0 0.0
    %1148 = vmatpush1.msra.mxu0 0.0
    %1149 = vmatprep.subr.mxu0 0.0
    %1150 = vmatpush1.msra.mxu0 0.0
    %1151 = vmatprep.subr.mxu0 0.0
    %1152 = vmatpush1.msra.mxu0 0.0
    %1153 = vmatprep.subr.mxu0 0.0
    %1154 = vmatpush1.msra.mxu0 0.0
    %1155 = vmatprep.subr.mxu0 0.0
    %1156 = vmatpush1.msra.mxu0 0.0
    %1157 = vmatprep.subr.mxu0 0.0
    %1158 = vmatpush1.msra.mxu0 0.0
    %1159 = vmatprep.subr.mxu0 0.0
    %1160 = vmatpush1.msra.mxu0 0.0
    %1161 = vmatprep.subr.mxu0 0.0
    %1162 = vmatpush1.msra.mxu0 0.0
    %1163 = vmatprep.subr.mxu0 0.0
    %1164 = vmatpush1.msra.mxu0 0.0
    %1165 = vmatprep.subr.mxu0 0.0
    %1166 = vmatpush1.msra.mxu0 0.0
    %1167 = vmatprep.subr.mxu0 0.0
    %1168 = vmatpush1.msra.mxu0 0.0
    %1169 = vmatprep.subr.mxu0 0.0
    %1170 = vmatpush1.msra.mxu0 0.0
    %1171 = vmatprep.subr.mxu0 0.0
    %1172 = vmatpush1.msra.mxu0 0.0
    %1173 = vmatprep.subr.mxu0 0.0
    %1174 = vmatpush1.msra.mxu0 0.0
    %1175 = vmatprep.subr.mxu0 0.0
    %1176 = vmatpush1.msra.mxu0 0.0
    %1177 = vmatprep.subr.mxu0 0.0
    %1178 = vmatpush1.msra.mxu0 0.0
    %1179 = vmatprep.subr.mxu0 0.0
    %1180 = vmatpush1.msra.mxu0 0.0
    %1181 = vmatprep.subr.mxu0 0.0
    %1182 = vmatpush1.msra.mxu0 0.0
    %1183 = vmatprep.subr.mxu0 0.0
    %1184 = vmatpush1.msra.mxu0 0.0
    %1185 = vmatprep.subr.mxu0 0.0
    %1186 = vmatpush1.msra.mxu0 0.0
    %1187 = vmatprep.subr.mxu0 0.0
    %1188 = vmatpush1.msra.mxu0 0.0
    %1189 = vmatprep.subr.mxu0 0.0
    %1190 = vmatpush1.msra.mxu0 0.0
    %1191 = vmatprep.subr.mxu0 0.0
    %1192 = vmatpush1.msra.mxu0 0.0
    %1193 = vmatprep.subr.mxu0 0.0
    %1194 = vmatpush1.msra.mxu0 0.0
    %1195 = vmatprep.subr.mxu0 0.0
    %1196 = vmatpush1.msra.mxu0 0.0
    %1197 = vmatprep.mubr.f32.mxu0 0.0
    %1198 = vmatmul.mubr.f32.gmra.mrb[0].mxu0 %v1131
    %v1199 = vpop.f32.mrb[0].mxu0
    %v1200 = vadd.f32 %v40, %v1199
    %v1201 = vpop.f32.mrb[0].mxu0
    %1202 = vdwg.mxu0
    %vm1203 = vcmask 25600
    %1204 = vst.msk [vmem:[#allocation2] sm:$0x3] %vm1203, %v1200
    %1205 = vmatprep.subr.mxu0 0.0
    %1206 = vmatpush1.msra.mxu0 %v27
    %1207 = vmatprep.subr.mxu0 0.0
    %1208 = vmatpush1.msra.mxu0 %v28
    %1209 = vmatprep.subr.mxu0 0.0
    %1210 = vmatpush1.msra.mxu0 %v29
    %1211 = vmatprep.subr.mxu0 0.0
    %1212 = vmatpush1.msra.mxu0 %v30
    %1213 = vmatprep.subr.mxu0 0.0
    %1214 = vmatpush1.msra.mxu0 0.0
    %1215 = vmatprep.subr.mxu0 0.0
    %1216 = vmatpush1.msra.mxu0 0.0
    %1217 = vmatprep.subr.mxu0 0.0
    %1218 = vmatpush1.msra.mxu0 0.0
    %1219 = vmatprep.subr.mxu0 0.0
    %1220 = vmatpush1.msra.mxu0 0.0
    %1221 = vmatprep.subr.mxu0 0.0
    %1222 = vmatpush1.msra.mxu0 0.0
    %1223 = vmatprep.subr.mxu0 0.0
    %1224 = vmatpush1.msra.mxu0 0.0
    %1225 = vmatprep.subr.mxu0 0.0
    %1226 = vmatpush1.msra.mxu0 0.0
    %1227 = vmatprep.subr.mxu0 0.0
    %1228 = vmatpush1.msra.mxu0 0.0
    %1229 = vmatprep.subr.mxu0 0.0
    %1230 = vmatpush1.msra.mxu0 0.0
    %1231 = vmatprep.subr.mxu0 0.0
    %1232 = vmatpush1.msra.mxu0 0.0
    %1233 = vmatprep.subr.mxu0 0.0
    %1234 = vmatpush1.msra.mxu0 0.0
    %1235 = vmatprep.subr.mxu0 0.0
    %1236 = vmatpush1.msra.mxu0 0.0
    %1237 = vmatprep.subr.mxu0 0.0
    %1238 = vmatpush1.msra.mxu0 0.0
    %1239 = vmatprep.subr.mxu0 0.0
    %1240 = vmatpush1.msra.mxu0 0.0
    %1241 = vmatprep.subr.mxu0 0.0
    %1242 = vmatpush1.msra.mxu0 0.0
    %1243 = vmatprep.subr.mxu0 0.0
    %1244 = vmatpush1.msra.mxu0 0.0
    %1245 = vmatprep.subr.mxu0 0.0
    %1246 = vmatpush1.msra.mxu0 0.0
    %1247 = vmatprep.subr.mxu0 0.0
    %1248 = vmatpush1.msra.mxu0 0.0
    %1249 = vmatprep.subr.mxu0 0.0
    %1250 = vmatpush1.msra.mxu0 0.0
    %1251 = vmatprep.subr.mxu0 0.0
    %1252 = vmatpush1.msra.mxu0 0.0
    %1253 = vmatprep.subr.mxu0 0.0
    %1254 = vmatpush1.msra.mxu0 0.0
    %1255 = vmatprep.subr.mxu0 0.0
    %1256 = vmatpush1.msra.mxu0 0.0
    %1257 = vmatprep.subr.mxu0 0.0
    %1258 = vmatpush1.msra.mxu0 0.0
    %1259 = vmatprep.subr.mxu0 0.0
    %1260 = vmatpush1.msra.mxu0 0.0
    %1261 = vmatprep.subr.mxu0 0.0
    %1262 = vmatpush1.msra.mxu0 0.0
    %1263 = vmatprep.subr.mxu0 0.0
    %1264 = vmatpush1.msra.mxu0 0.0
    %1265 = vmatprep.subr.mxu0 0.0
    %1266 = vmatpush1.msra.mxu0 0.0
    %1267 = vmatprep.subr.mxu0 0.0
    %1268 = vmatpush1.msra.mxu0 0.0
    %1269 = vmatprep.mubr.f32.mxu0 0.0
    %1270 = vmatmul.mubr.f32.gmra.mrb[0].mxu0 %v1131
    %v1271 = vpop.f32.mrb[0].mxu0
    %v1272 = vadd.f32 0.0, %v1271
    %v1273 = vpop.f32.mrb[0].mxu0
    %1274 = vdwg.mxu0
    %v1276 = vsel %vm43, %v1200, 0
    %1278 = vmatprep.subr.mxu0 0.0
    %1279 = vmatpush1.msra.mxu0 %v1030
    %1280 = vmatprep.subr.mxu0 0.0
    %1281 = vmatpush1.msra.mxu0 0.0
    %1282 = vmatprep.subr.mxu0 0.0
    %1283 = vmatpush1.msra.mxu0 0.0
    %1284 = vmatprep.subr.mxu0 0.0
    %1285 = vmatpush1.msra.mxu0 0.0
    %1286 = vmatprep.subr.mxu0 0.0
    %1287 = vmatpush1.msra.mxu0 0.0
    %1288 = vmatprep.subr.mxu0 0.0
    %1289 = vmatpush1.msra.mxu0 0.0
    %1290 = vmatprep.subr.mxu0 0.0
    %1291 = vmatpush1.msra.mxu0 0.0
    %1292 = vmatprep.subr.mxu0 0.0
    %1293 = vmatpush1.msra.mxu0 0.0
    %1294 = vmatprep.subr.mxu0 0.0
    %1295 = vmatpush1.msra.mxu0 0.0
    %1296 = vmatprep.subr.mxu0 0.0
    %1297 = vmatpush1.msra.mxu0 0.0
    %1298 = vmatprep.subr.mxu0 0.0
    %1299 = vmatpush1.msra.mxu0 0.0
    %1300 = vmatprep.subr.mxu0 0.0
    %1301 = vmatpush1.msra.mxu0 0.0
    %1302 = vmatprep.subr.mxu0 0.0
    %1303 = vmatpush1.msra.mxu0 0.0
    %1304 = vmatprep.subr.mxu0 0.0
    %1305 = vmatpush1.msra.mxu0 0.0
    %1306 = vmatprep.subr.mxu0 0.0
    %1307 = vmatpush1.msra.mxu0 0.0
    %1308 = vmatprep.subr.mxu0 0.0
    %1309 = vmatpush1.msra.mxu0 0.0
    %1310 = vmatprep.subr.mxu0 0.0
    %1311 = vmatpush1.msra.mxu0 0.0
    %1312 = vmatprep.subr.mxu0 0.0
    %1313 = vmatpush1.msra.mxu0 0.0
    %1314 = vmatprep.subr.mxu0 0.0
    %1315 = vmatpush1.msra.mxu0 0.0
    %1316 = vmatprep.subr.mxu0 0.0
    %1317 = vmatpush1.msra.mxu0 0.0
    %1318 = vmatprep.subr.mxu0 0.0
    %1319 = vmatpush1.msra.mxu0 0.0
    %1320 = vmatprep.subr.mxu0 0.0
    %1321 = vmatpush1.msra.mxu0 0.0
    %1322 = vmatprep.subr.mxu0 0.0
    %1323 = vmatpush1.msra.mxu0 0.0
    %1324 = vmatprep.subr.mxu0 0.0
    %1325 = vmatpush1.msra.mxu0 0.0
    %1326 = vmatprep.subr.mxu0 0.0
    %1327 = vmatpush1.msra.mxu0 0.0
    %1328 = vmatprep.subr.mxu0 0.0
    %1329 = vmatpush1.msra.mxu0 0.0
    %1330 = vmatprep.subr.mxu0 0.0
    %1331 = vmatpush1.msra.mxu0 0.0
    %1332 = vmatprep.subr.mxu0 0.0
    %1333 = vmatpush1.msra.mxu0 0.0
    %1334 = vmatprep.subr.mxu0 0.0
    %1335 = vmatpush1.msra.mxu0 0.0
    %1336 = vmatprep.subr.mxu0 0.0
    %1337 = vmatpush1.msra.mxu0 0.0
    %1338 = vmatprep.subr.mxu0 0.0
    %1339 = vmatpush1.msra.mxu0 0.0
    %1340 = vmatprep.subr.mxu0 0.0
    %1341 = vmatpush1.msra.mxu0 0.0
    %1342 = vmatprep.mubr.f32.mxu0 0.0
    %1343 = vmatmul.mubr.f32.gmra.mrb[0].mxu0 %v1276
    %v1344 = vpop.f32.mrb[0].mxu0
    %v1345 = vadd.f32 %v1272, %v1344
    %v1346 = vpop.f32.mrb[0].mxu0
    %1347 = vdwg.mxu0
    %v1348 = vadd.f32 %v1345, %v38
    %v1349 = vxor.u32 %v1348, 2147483648
    %v1350 = vmul.f32 %v1349, 1.442695
    %v1351 = vpow.pop %v1350
    %v1352 = vadd.f32 %v1351, 1.0
    %v1353 = vrcp.pop %v1352
    %v1354 = vmul.f32 1.0, %v1353
    %1356 = vrot.lane.b32.xlu0 %v1348, 32
    %v1357 = vpop.permute.xlu0 %1356
    %v1359 = vmul.f32 %v1354, %v1357
    %1361 = vrot.lane.b32.xlu0 %v1359, 64
    %v1362 = vpop.permute.xlu0 %1361
    %v1364 = vadd.f32 %v1348, %v1362
    %v1365 = vtanh.pop %v1364
    %v1366 = vsub.f32 1.0, %v1354
    %1368 = vrot.lane.b32.xlu0 %v1365, 96
    %v1369 = vpop.permute.xlu0 %1368
    %v1371 = vmul.f32 %v1366, %v1369
    %v1372 = vmul.f32 %v1354, %v1127
    %v1373 = vadd.f32 %v1371, %v1372
    %1375 = vrot.lane.b32.xlu0 %v1373, 96
    %v1376 = vpop.permute.xlu0 %1375
    %v1377 = vsel %vm129, %v1376, 0
    %1379 = vmatprep.subr.mxu0 0.0
    %1380 = vmatpush1.msra.mxu0 %v32
    %1381 = vmatprep.subr.mxu0 0.0
    %1382 = vmatpush1.msra.mxu0 %v33
    %1383 = vmatprep.subr.mxu0 0.0
    %1384 = vmatpush1.msra.mxu0 %v34
    %1385 = vmatprep.subr.mxu0 0.0
    %1386 = vmatpush1.msra.mxu0 %v35
    %1387 = vmatprep.subr.mxu0 0.0
    %1388 = vmatpush1.msra.mxu0 0.0
    %1389 = vmatprep.subr.mxu0 0.0
    %1390 = vmatpush1.msra.mxu0 0.0
    %1391 = vmatprep.subr.mxu0 0.0
    %1392 = vmatpush1.msra.mxu0 0.0
    %1393 = vmatprep.subr.mxu0 0.0
    %1394 = vmatpush1.msra.mxu0 0.0
    %1395 = vmatprep.subr.mxu0 0.0
    %1396 = vmatpush1.msra.mxu0 0.0
    %1397 = vmatprep.subr.mxu0 0.0
    %1398 = vmatpush1.msra.mxu0 0.0
    %1399 = vmatprep.subr.mxu0 0.0
    %1400 = vmatpush1.msra.mxu0 0.0
    %1401 = vmatprep.subr.mxu0 0.0
    %1402 = vmatpush1.msra.mxu0 0.0
    %1403 = vmatprep.subr.mxu0 0.0
    %1404 = vmatpush1.msra.mxu0 0.0
    %1405 = vmatprep.subr.mxu0 0.0
    %1406 = vmatpush1.msra.mxu0 0.0
    %1407 = vmatprep.subr.mxu0 0.0
    %1408 = vmatpush1.msra.mxu0 0.0
    %1409 = vmatprep.subr.mxu0 0.0
    %1410 = vmatpush1.msra.mxu0 0.0
    %1411 = vmatprep.subr.mxu0 0.0
    %1412 = vmatpush1.msra.mxu0 0.0
    %1413 = vmatprep.subr.mxu0 0.0
    %1414 = vmatpush1.msra.mxu0 0.0
    %1415 = vmatprep.subr.mxu0 0.0
    %1416 = vmatpush1.msra.mxu0 0.0
    %1417 = vmatprep.subr.mxu0 0.0
    %1418 = vmatpush1.msra.mxu0 0.0
    %1419 = vmatprep.subr.mxu0 0.0
    %1420 = vmatpush1.msra.mxu0 0.0
    %1421 = vmatprep.subr.mxu0 0.0
    %1422 = vmatpush1.msra.mxu0 0.0
    %1423 = vmatprep.subr.mxu0 0.0
    %1424 = vmatpush1.msra.mxu0 0.0
    %1425 = vmatprep.subr.mxu0 0.0
    %1426 = vmatpush1.msra.mxu0 0.0
    %1427 = vmatprep.subr.mxu0 0.0
    %1428 = vmatpush1.msra.mxu0 0.0
    %1429 = vmatprep.subr.mxu0 0.0
    %1430 = vmatpush1.msra.mxu0 0.0
    %1431 = vmatprep.subr.mxu0 0.0
    %1432 = vmatpush1.msra.mxu0 0.0
    %1433 = vmatprep.subr.mxu0 0.0
    %1434 = vmatpush1.msra.mxu0 0.0
    %1435 = vmatprep.subr.mxu0 0.0
    %1436 = vmatpush1.msra.mxu0 0.0
    %1437 = vmatprep.subr.mxu0 0.0
    %1438 = vmatpush1.msra.mxu0 0.0
    %1439 = vmatprep.subr.mxu0 0.0
    %1440 = vmatpush1.msra.mxu0 0.0
    %1441 = vmatprep.subr.mxu0 0.0
    %1442 = vmatpush1.msra.mxu0 0.0
    %1443 = vmatprep.mubr.f32.mxu0 0.0
    %1444 = vmatmul.mubr.f32.gmra.mrb[0].mxu0 %v1377
    %v1445 = vpop.f32.mrb[0].mxu0
    %v1446 = vadd.f32 %v40, %v1445
    %v1447 = vpop.f32.mrb[0].mxu0
    %1448 = vdwg.mxu0
    %s1449 = scalar_lea.vmem [#allocation2], 2
    %1450 = vst.msk [vmem:[%s1449] sm:$0x3] %vm1203, %v1446
    %1451 = vmatprep.subr.mxu0 0.0
    %1452 = vmatpush1.msra.mxu0 %v27
    %1453 = vmatprep.subr.mxu0 0.0
    %1454 = vmatpush1.msra.mxu0 %v28
    %1455 = vmatprep.subr.mxu0 0.0
    %1456 = vmatpush1.msra.mxu0 %v29
    %1457 = vmatprep.subr.mxu0 0.0
    %1458 = vmatpush1.msra.mxu0 %v30
    %1459 = vmatprep.subr.mxu0 0.0
    %1460 = vmatpush1.msra.mxu0 0.0
    %1461 = vmatprep.subr.mxu0 0.0
    %1462 = vmatpush1.msra.mxu0 0.0
    %1463 = vmatprep.subr.mxu0 0.0
    %1464 = vmatpush1.msra.mxu0 0.0
    %1465 = vmatprep.subr.mxu0 0.0
    %1466 = vmatpush1.msra.mxu0 0.0
    %1467 = vmatprep.subr.mxu0 0.0
    %1468 = vmatpush1.msra.mxu0 0.0
    %1469 = vmatprep.subr.mxu0 0.0
    %1470 = vmatpush1.msra.mxu0 0.0
    %1471 = vmatprep.subr.mxu0 0.0
    %1472 = vmatpush1.msra.mxu0 0.0
    %1473 = vmatprep.subr.mxu0 0.0
    %1474 = vmatpush1.msra.mxu0 0.0
    %1475 = vmatprep.subr.mxu0 0.0
    %1476 = vmatpush1.msra.mxu0 0.0
    %1477 = vmatprep.subr.mxu0 0.0
    %1478 = vmatpush1.msra.mxu0 0.0
    %1479 = vmatprep.subr.mxu0 0.0
    %1480 = vmatpush1.msra.mxu0 0.0
    %1481 = vmatprep.subr.mxu0 0.0
    %1482 = vmatpush1.msra.mxu0 0.0
    %1483 = vmatprep.subr.mxu0 0.0
    %1484 = vmatpush1.msra.mxu0 0.0
    %1485 = vmatprep.subr.mxu0 0.0
    %1486 = vmatpush1.msra.mxu0 0.0
    %1487 = vmatprep.subr.mxu0 0.0
    %1488 = vmatpush1.msra.mxu0 0.0
    %1489 = vmatprep.subr.mxu0 0.0
    %1490 = vmatpush1.msra.mxu0 0.0
    %1491 = vmatprep.subr.mxu0 0.0
    %1492 = vmatpush1.msra.mxu0 0.0
    %1493 = vmatprep.subr.mxu0 0.0
    %1494 = vmatpush1.msra.mxu0 0.0
    %1495 = vmatprep.subr.mxu0 0.0
    %1496 = vmatpush1.msra.mxu0 0.0
    %1497 = vmatprep.subr.mxu0 0.0
    %1498 = vmatpush1.msra.mxu0 0.0
    %1499 = vmatprep.subr.mxu0 0.0
    %1500 = vmatpush1.msra.mxu0 0.0
    %1501 = vmatprep.subr.mxu0 0.0
    %1502 = vmatpush1.msra.mxu0 0.0
    %1503 = vmatprep.subr.mxu0 0.0
    %1504 = vmatpush1.msra.mxu0 0.0
    %1505 = vmatprep.subr.mxu0 0.0
    %1506 = vmatpush1.msra.mxu0 0.0
    %1507 = vmatprep.subr.mxu0 0.0
    %1508 = vmatpush1.msra.mxu0 0.0
    %1509 = vmatprep.subr.mxu0 0.0
    %1510 = vmatpush1.msra.mxu0 0.0
    %1511 = vmatprep.subr.mxu0 0.0
    %1512 = vmatpush1.msra.mxu0 0.0
    %1513 = vmatprep.subr.mxu0 0.0
    %1514 = vmatpush1.msra.mxu0 0.0
    %1515 = vmatprep.mubr.f32.mxu0 0.0
    %1516 = vmatmul.mubr.f32.gmra.mrb[0].mxu0 %v1377
    %v1517 = vpop.f32.mrb[0].mxu0
    %v1518 = vadd.f32 0.0, %v1517
    %v1519 = vpop.f32.mrb[0].mxu0
    %1520 = vdwg.mxu0
    %v1522 = vsel %vm43, %v1446, 0
    %1524 = vmatprep.subr.mxu0 0.0
    %1525 = vmatpush1.msra.mxu0 %v1030
    %1526 = vmatprep.subr.mxu0 0.0
    %1527 = vmatpush1.msra.mxu0 0.0
    %1528 = vmatprep.subr.mxu0 0.0
    %1529 = vmatpush1.msra.mxu0 0.0
    %1530 = vmatprep.subr.mxu0 0.0
    %1531 = vmatpush1.msra.mxu0 0.0
    %1532 = vmatprep.subr.mxu0 0.0
    %1533 = vmatpush1.msra.mxu0 0.0
    %1534 = vmatprep.subr.mxu0 0.0
    %1535 = vmatpush1.msra.mxu0 0.0
    %1536 = vmatprep.subr.mxu0 0.0
    %1537 = vmatpush1.msra.mxu0 0.0
    %1538 = vmatprep.subr.mxu0 0.0
    %1539 = vmatpush1.msra.mxu0 0.0
    %1540 = vmatprep.subr.mxu0 0.0
    %1541 = vmatpush1.msra.mxu0 0.0
    %1542 = vmatprep.subr.mxu0 0.0
    %1543 = vmatpush1.msra.mxu0 0.0
    %1544 = vmatprep.subr.mxu0 0.0
    %1545 = vmatpush1.msra.mxu0 0.0
    %1546 = vmatprep.subr.mxu0 0.0
    %1547 = vmatpush1.msra.mxu0 0.0
    %1548 = vmatprep.subr.mxu0 0.0
    %1549 = vmatpush1.msra.mxu0 0.0
    %1550 = vmatprep.subr.mxu0 0.0
    %1551 = vmatpush1.msra.mxu0 0.0
    %1552 = vmatprep.subr.mxu0 0.0
    %1553 = vmatpush1.msra.mxu0 0.0
    %1554 = vmatprep.subr.mxu0 0.0
    %1555 = vmatpush1.msra.mxu0 0.0
    %1556 = vmatprep.subr.mxu0 0.0
    %1557 = vmatpush1.msra.mxu0 0.0
    %1558 = vmatprep.subr.mxu0 0.0
    %1559 = vmatpush1.msra.mxu0 0.0
    %1560 = vmatprep.subr.mxu0 0.0
    %1561 = vmatpush1.msra.mxu0 0.0
    %1562 = vmatprep.subr.mxu0 0.0
    %1563 = vmatpush1.msra.mxu0 0.0
    %1564 = vmatprep.subr.mxu0 0.0
    %1565 = vmatpush1.msra.mxu0 0.0
    %1566 = vmatprep.subr.mxu0 0.0
    %1567 = vmatpush1.msra.mxu0 0.0
    %1568 = vmatprep.subr.mxu0 0.0
    %1569 = vmatpush1.msra.mxu0 0.0
    %1570 = vmatprep.subr.mxu0 0.0
    %1571 = vmatpush1.msra.mxu0 0.0
    %1572 = vmatprep.subr.mxu0 0.0
    %1573 = vmatpush1.msra.mxu0 0.0
    %1574 = vmatprep.subr.mxu0 0.0
    %1575 = vmatpush1.msra.mxu0 0.0
    %1576 = vmatprep.subr.mxu0 0.0
    %1577 = vmatpush1.msra.mxu0 0.0
    %1578 = vmatprep.subr.mxu0 0.0
    %1579 = vmatpush1.msra.mxu0 0.0
    %1580 = vmatprep.subr.mxu0 0.0
    %1581 = vmatpush1.msra.mxu0 0.0
    %1582 = vmatprep.subr.mxu0 0.0
    %1583 = vmatpush1.msra.mxu0 0.0
    %1584 = vmatprep.subr.mxu0 0.0
    %1585 = vmatpush1.msra.mxu0 0.0
    %1586 = vmatprep.subr.mxu0 0.0
    %1587 = vmatpush1.msra.mxu0 0.0
    %1588 = vmatprep.mubr.f32.mxu0 0.0
    %1589 = vmatmul.mubr.f32.gmra.mrb[0].mxu0 %v1522
    %v1590 = vpop.f32.mrb[0].mxu0
    %v1591 = vadd.f32 %v1518, %v1590
    %v1592 = vpop.f32.mrb[0].mxu0
    %1593 = vdwg.mxu0
    %v1594 = vadd.f32 %v1591, %v38
    %v1595 = vxor.u32 %v1594, 2147483648
    %v1596 = vmul.f32 %v1595, 1.442695
    %v1597 = vpow.pop %v1596
    %v1598 = vadd.f32 %v1597, 1.0
    %v1599 = vrcp.pop %v1598
    %v1600 = vmul.f32 1.0, %v1599
    %1602 = vrot.lane.b32.xlu0 %v1594, 32
    %v1603 = vpop.permute.xlu0 %1602
    %v1605 = vmul.f32 %v1600, %v1603
    %1607 = vrot.lane.b32.xlu0 %v1605, 64
    %v1608 = vpop.permute.xlu0 %1607
    %v1610 = vadd.f32 %v1594, %v1608
    %v1611 = vtanh.pop %v1610
    %v1612 = vsub.f32 1.0, %v1600
    %1614 = vrot.lane.b32.xlu0 %v1611, 96
    %v1615 = vpop.permute.xlu0 %1614
    %v1617 = vmul.f32 %v1612, %v1615
    %v1618 = vmul.f32 %v1600, %v1373
    %v1619 = vadd.f32 %v1617, %v1618
    %1621 = vrot.lane.b32.xlu0 %v1619, 96
    %v1622 = vpop.permute.xlu0 %1621
    %v1623 = vsel %vm129, %v1622, 0
    %1625 = vmatprep.subr.mxu0 0.0
    %1626 = vmatpush1.msra.mxu0 %v32
    %1627 = vmatprep.subr.mxu0 0.0
    %1628 = vmatpush1.msra.mxu0 %v33
    %1629 = vmatprep.subr.mxu0 0.0
    %1630 = vmatpush1.msra.mxu0 %v34
    %1631 = vmatprep.subr.mxu0 0.0
    %1632 = vmatpush1.msra.mxu0 %v35
    %1633 = vmatprep.subr.mxu0 0.0
    %1634 = vmatpush1.msra.mxu0 0.0
    %1635 = vmatprep.subr.mxu0 0.0
    %1636 = vmatpush1.msra.mxu0 0.0
    %1637 = vmatprep.subr.mxu0 0.0
    %1638 = vmatpush1.msra.mxu0 0.0
    %1639 = vmatprep.subr.mxu0 0.0
    %1640 = vmatpush1.msra.mxu0 0.0
    %1641 = vmatprep.subr.mxu0 0.0
    %1642 = vmatpush1.msra.mxu0 0.0
    %1643 = vmatprep.subr.mxu0 0.0
    %1644 = vmatpush1.msra.mxu0 0.0
    %1645 = vmatprep.subr.mxu0 0.0
    %1646 = vmatpush1.msra.mxu0 0.0
    %1647 = vmatprep.subr.mxu0 0.0
    %1648 = vmatpush1.msra.mxu0 0.0
    %1649 = vmatprep.subr.mxu0 0.0
    %1650 = vmatpush1.msra.mxu0 0.0
    %1651 = vmatprep.subr.mxu0 0.0
    %1652 = vmatpush1.msra.mxu0 0.0
    %1653 = vmatprep.subr.mxu0 0.0
    %1654 = vmatpush1.msra.mxu0 0.0
    %1655 = vmatprep.subr.mxu0 0.0
    %1656 = vmatpush1.msra.mxu0 0.0
    %1657 = vmatprep.subr.mxu0 0.0
    %1658 = vmatpush1.msra.mxu0 0.0
    %1659 = vmatprep.subr.mxu0 0.0
    %1660 = vmatpush1.msra.mxu0 0.0
    %1661 = vmatprep.subr.mxu0 0.0
    %1662 = vmatpush1.msra.mxu0 0.0
    %1663 = vmatprep.subr.mxu0 0.0
    %1664 = vmatpush1.msra.mxu0 0.0
    %1665 = vmatprep.subr.mxu0 0.0
    %1666 = vmatpush1.msra.mxu0 0.0
    %1667 = vmatprep.subr.mxu0 0.0
    %1668 = vmatpush1.msra.mxu0 0.0
    %1669 = vmatprep.subr.mxu0 0.0
    %1670 = vmatpush1.msra.mxu0 0.0
    %1671 = vmatprep.subr.mxu0 0.0
    %1672 = vmatpush1.msra.mxu0 0.0
    %1673 = vmatprep.subr.mxu0 0.0
    %1674 = vmatpush1.msra.mxu0 0.0
    %1675 = vmatprep.subr.mxu0 0.0
    %1676 = vmatpush1.msra.mxu0 0.0
    %1677 = vmatprep.subr.mxu0 0.0
    %1678 = vmatpush1.msra.mxu0 0.0
    %1679 = vmatprep.subr.mxu0 0.0
    %1680 = vmatpush1.msra.mxu0 0.0
    %1681 = vmatprep.subr.mxu0 0.0
    %1682 = vmatpush1.msra.mxu0 0.0
    %1683 = vmatprep.subr.mxu0 0.0
    %1684 = vmatpush1.msra.mxu0 0.0
    %1685 = vmatprep.subr.mxu0 0.0
    %1686 = vmatpush1.msra.mxu0 0.0
    %1687 = vmatprep.subr.mxu0 0.0
    %1688 = vmatpush1.msra.mxu0 0.0
    %1689 = vmatprep.mubr.f32.mxu0 0.0
    %1690 = vmatmul.mubr.f32.gmra.mrb[0].mxu0 %v1623
    %v1691 = vpop.f32.mrb[0].mxu0
    %v1692 = vadd.f32 %v40, %v1691
    %v1693 = vpop.f32.mrb[0].mxu0
    %1694 = vdwg.mxu0
    %s1695 = scalar_lea.vmem [#allocation2], 4
    %1696 = vst.msk [vmem:[%s1695] sm:$0x3] %vm1203, %v1692
    %1697 = vmatprep.subr.mxu0 0.0
    %1698 = vmatpush1.msra.mxu0 %v27
    %1699 = vmatprep.subr.mxu0 0.0
    %1700 = vmatpush1.msra.mxu0 %v28
    %1701 = vmatprep.subr.mxu0 0.0
    %1702 = vmatpush1.msra.mxu0 %v29
    %1703 = vmatprep.subr.mxu0 0.0
    %1704 = vmatpush1.msra.mxu0 %v30
    %1705 = vmatprep.subr.mxu0 0.0
    %1706 = vmatpush1.msra.mxu0 0.0
    %1707 = vmatprep.subr.mxu0 0.0
    %1708 = vmatpush1.msra.mxu0 0.0
    %1709 = vmatprep.subr.mxu0 0.0
    %1710 = vmatpush1.msra.mxu0 0.0
    %1711 = vmatprep.subr.mxu0 0.0
    %1712 = vmatpush1.msra.mxu0 0.0
    %1713 = vmatprep.subr.mxu0 0.0
    %1714 = vmatpush1.msra.mxu0 0.0
    %1715 = vmatprep.subr.mxu0 0.0
    %1716 = vmatpush1.msra.mxu0 0.0
    %1717 = vmatprep.subr.mxu0 0.0
    %1718 = vmatpush1.msra.mxu0 0.0
    %1719 = vmatprep.subr.mxu0 0.0
    %1720 = vmatpush1.msra.mxu0 0.0
    %1721 = vmatprep.subr.mxu0 0.0
    %1722 = vmatpush1.msra.mxu0 0.0
    %1723 = vmatprep.subr.mxu0 0.0
    %1724 = vmatpush1.msra.mxu0 0.0
    %1725 = vmatprep.subr.mxu0 0.0
    %1726 = vmatpush1.msra.mxu0 0.0
    %1727 = vmatprep.subr.mxu0 0.0
    %1728 = vmatpush1.msra.mxu0 0.0
    %1729 = vmatprep.subr.mxu0 0.0
    %1730 = vmatpush1.msra.mxu0 0.0
    %1731 = vmatprep.subr.mxu0 0.0
    %1732 = vmatpush1.msra.mxu0 0.0
    %1733 = vmatprep.subr.mxu0 0.0
    %1734 = vmatpush1.msra.mxu0 0.0
    %1735 = vmatprep.subr.mxu0 0.0
    %1736 = vmatpush1.msra.mxu0 0.0
    %1737 = vmatprep.subr.mxu0 0.0
    %1738 = vmatpush1.msra.mxu0 0.0
    %1739 = vmatprep.subr.mxu0 0.0
    %1740 = vmatpush1.msra.mxu0 0.0
    %1741 = vmatprep.subr.mxu0 0.0
    %1742 = vmatpush1.msra.mxu0 0.0
    %1743 = vmatprep.subr.mxu0 0.0
    %1744 = vmatpush1.msra.mxu0 0.0
    %1745 = vmatprep.subr.mxu0 0.0
    %1746 = vmatpush1.msra.mxu0 0.0
    %1747 = vmatprep.subr.mxu0 0.0
    %1748 = vmatpush1.msra.mxu0 0.0
    %1749 = vmatprep.subr.mxu0 0.0
    %1750 = vmatpush1.msra.mxu0 0.0
    %1751 = vmatprep.subr.mxu0 0.0
    %1752 = vmatpush1.msra.mxu0 0.0
    %1753 = vmatprep.subr.mxu0 0.0
    %1754 = vmatpush1.msra.mxu0 0.0
    %1755 = vmatprep.subr.mxu0 0.0
    %1756 = vmatpush1.msra.mxu0 0.0
    %1757 = vmatprep.subr.mxu0 0.0
    %1758 = vmatpush1.msra.mxu0 0.0
    %1759 = vmatprep.subr.mxu0 0.0
    %1760 = vmatpush1.msra.mxu0 0.0
    %1761 = vmatprep.mubr.f32.mxu0 0.0
    %1762 = vmatmul.mubr.f32.gmra.mrb[0].mxu0 %v1623
    %v1763 = vpop.f32.mrb[0].mxu0
    %v1764 = vadd.f32 0.0, %v1763
    %v1765 = vpop.f32.mrb[0].mxu0
    %1766 = vdwg.mxu0
    %v1768 = vsel %vm43, %v1692, 0
    %1770 = vmatprep.subr.mxu0 0.0
    %1771 = vmatpush1.msra.mxu0 %v1030
    %1772 = vmatprep.subr.mxu0 0.0
    %1773 = vmatpush1.msra.mxu0 0.0
    %1774 = vmatprep.subr.mxu0 0.0
    %1775 = vmatpush1.msra.mxu0 0.0
    %1776 = vmatprep.subr.mxu0 0.0
    %1777 = vmatpush1.msra.mxu0 0.0
    %1778 = vmatprep.subr.mxu0 0.0
    %1779 = vmatpush1.msra.mxu0 0.0
    %1780 = vmatprep.subr.mxu0 0.0
    %1781 = vmatpush1.msra.mxu0 0.0
    %1782 = vmatprep.subr.mxu0 0.0
    %1783 = vmatpush1.msra.mxu0 0.0
    %1784 = vmatprep.subr.mxu0 0.0
    %1785 = vmatpush1.msra.mxu0 0.0
    %1786 = vmatprep.subr.mxu0 0.0
    %1787 = vmatpush1.msra.mxu0 0.0
    %1788 = vmatprep.subr.mxu0 0.0
    %1789 = vmatpush1.msra.mxu0 0.0
    %1790 = vmatprep.subr.mxu0 0.0
    %1791 = vmatpush1.msra.mxu0 0.0
    %1792 = vmatprep.subr.mxu0 0.0
    %1793 = vmatpush1.msra.mxu0 0.0
    %1794 = vmatprep.subr.mxu0 0.0
    %1795 = vmatpush1.msra.mxu0 0.0
    %1796 = vmatprep.subr.mxu0 0.0
    %1797 = vmatpush1.msra.mxu0 0.0
    %1798 = vmatprep.subr.mxu0 0.0
    %1799 = vmatpush1.msra.mxu0 0.0
    %1800 = vmatprep.subr.mxu0 0.0
    %1801 = vmatpush1.msra.mxu0 0.0
    %1802 = vmatprep.subr.mxu0 0.0
    %1803 = vmatpush1.msra.mxu0 0.0
    %1804 = vmatprep.subr.mxu0 0.0
    %1805 = vmatpush1.msra.mxu0 0.0
    %1806 = vmatprep.subr.mxu0 0.0
    %1807 = vmatpush1.msra.mxu0 0.0
    %1808 = vmatprep.subr.mxu0 0.0
    %1809 = vmatpush1.msra.mxu0 0.0
    %1810 = vmatprep.subr.mxu0 0.0
    %1811 = vmatpush1.msra.mxu0 0.0
    %1812 = vmatprep.subr.mxu0 0.0
    %1813 = vmatpush1.msra.mxu0 0.0
    %1814 = vmatprep.subr.mxu0 0.0
    %1815 = vmatpush1.msra.mxu0 0.0
    %1816 = vmatprep.subr.mxu0 0.0
    %1817 = vmatpush1.msra.mxu0 0.0
    %1818 = vmatprep.subr.mxu0 0.0
    %1819 = vmatpush1.msra.mxu0 0.0
    %1820 = vmatprep.subr.mxu0 0.0
    %1821 = vmatpush1.msra.mxu0 0.0
    %1822 = vmatprep.subr.mxu0 0.0
    %1823 = vmatpush1.msra.mxu0 0.0
    %1824 = vmatprep.subr.mxu0 0.0
    %1825 = vmatpush1.msra.mxu0 0.0
    %1826 = vmatprep.subr.mxu0 0.0
    %1827 = vmatpush1.msra.mxu0 0.0
    %1828 = vmatprep.subr.mxu0 0.0
    %1829 = vmatpush1.msra.mxu0 0.0
    %1830 = vmatprep.subr.mxu0 0.0
    %1831 = vmatpush1.msra.mxu0 0.0
    %1832 = vmatprep.subr.mxu0 0.0
    %1833 = vmatpush1.msra.mxu0 0.0
    %1834 = vmatprep.mubr.f32.mxu0 0.0
    %1835 = vmatmul.mubr.f32.gmra.mrb[0].mxu0 %v1768
    %v1836 = vpop.f32.mrb[0].mxu0
    %v1837 = vadd.f32 %v1764, %v1836
    %v1838 = vpop.f32.mrb[0].mxu0
    %1839 = vdwg.mxu0
    %v1840 = vadd.f32 %v1837, %v38
    %v1841 = vxor.u32 %v1840, 2147483648
    %v1842 = vmul.f32 %v1841, 1.442695
    %v1843 = vpow.pop %v1842
    %v1844 = vadd.f32 %v1843, 1.0
    %v1845 = vrcp.pop %v1844
    %v1846 = vmul.f32 1.0, %v1845
    %1848 = vrot.lane.b32.xlu0 %v1840, 32
    %v1849 = vpop.permute.xlu0 %1848
    %v1851 = vmul.f32 %v1846, %v1849
    %1853 = vrot.lane.b32.xlu0 %v1851, 64
    %v1854 = vpop.permute.xlu0 %1853
    %v1856 = vadd.f32 %v1840, %v1854
    %v1857 = vtanh.pop %v1856
    %v1858 = vsub.f32 1.0, %v1846
    %1860 = vrot.lane.b32.xlu0 %v1857, 96
    %v1861 = vpop.permute.xlu0 %1860
    %v1863 = vmul.f32 %v1858, %v1861
    %v1864 = vmul.f32 %v1846, %v1619
    %v1865 = vadd.f32 %v1863, %v1864
    %1867 = vrot.lane.b32.xlu0 %v1865, 96
    %v1868 = vpop.permute.xlu0 %1867
    %v1869 = vsel %vm129, %v1868, 0
    %1871 = vmatprep.subr.mxu0 0.0
    %1872 = vmatpush1.msra.mxu0 %v32
    %1873 = vmatprep.subr.mxu0 0.0
    %1874 = vmatpush1.msra.mxu0 %v33
    %1875 = vmatprep.subr.mxu0 0.0
    %1876 = vmatpush1.msra.mxu0 %v34
    %1877 = vmatprep.subr.mxu0 0.0
    %1878 = vmatpush1.msra.mxu0 %v35
    %1879 = vmatprep.subr.mxu0 0.0
    %1880 = vmatpush1.msra.mxu0 0.0
    %1881 = vmatprep.subr.mxu0 0.0
    %1882 = vmatpush1.msra.mxu0 0.0
    %1883 = vmatprep.subr.mxu0 0.0
    %1884 = vmatpush1.msra.mxu0 0.0
    %1885 = vmatprep.subr.mxu0 0.0
    %1886 = vmatpush1.msra.mxu0 0.0
    %1887 = vmatprep.subr.mxu0 0.0
    %1888 = vmatpush1.msra.mxu0 0.0
    %1889 = vmatprep.subr.mxu0 0.0
    %1890 = vmatpush1.msra.mxu0 0.0
    %1891 = vmatprep.subr.mxu0 0.0
    %1892 = vmatpush1.msra.mxu0 0.0
    %1893 = vmatprep.subr.mxu0 0.0
    %1894 = vmatpush1.msra.mxu0 0.0
    %1895 = vmatprep.subr.mxu0 0.0
    %1896 = vmatpush1.msra.mxu0 0.0
    %1897 = vmatprep.subr.mxu0 0.0
    %1898 = vmatpush1.msra.mxu0 0.0
    %1899 = vmatprep.subr.mxu0 0.0
    %1900 = vmatpush1.msra.mxu0 0.0
    %1901 = vmatprep.subr.mxu0 0.0
    %1902 = vmatpush1.msra.mxu0 0.0
    %1903 = vmatprep.subr.mxu0 0.0
    %1904 = vmatpush1.msra.mxu0 0.0
    %1905 = vmatprep.subr.mxu0 0.0
    %1906 = vmatpush1.msra.mxu0 0.0
    %1907 = vmatprep.subr.mxu0 0.0
    %1908 = vmatpush1.msra.mxu0 0.0
    %1909 = vmatprep.subr.mxu0 0.0
    %1910 = vmatpush1.msra.mxu0 0.0
    %1911 = vmatprep.subr.mxu0 0.0
    %1912 = vmatpush1.msra.mxu0 0.0
    %1913 = vmatprep.subr.mxu0 0.0
    %1914 = vmatpush1.msra.mxu0 0.0
    %1915 = vmatprep.subr.mxu0 0.0
    %1916 = vmatpush1.msra.mxu0 0.0
    %1917 = vmatprep.subr.mxu0 0.0
    %1918 = vmatpush1.msra.mxu0 0.0
    %1919 = vmatprep.subr.mxu0 0.0
    %1920 = vmatpush1.msra.mxu0 0.0
    %1921 = vmatprep.subr.mxu0 0.0
    %1922 = vmatpush1.msra.mxu0 0.0
    %1923 = vmatprep.subr.mxu0 0.0
    %1924 = vmatpush1.msra.mxu0 0.0
    %1925 = vmatprep.subr.mxu0 0.0
    %1926 = vmatpush1.msra.mxu0 0.0
    %1927 = vmatprep.subr.mxu0 0.0
    %1928 = vmatpush1.msra.mxu0 0.0
    %1929 = vmatprep.subr.mxu0 0.0
    %1930 = vmatpush1.msra.mxu0 0.0
    %1931 = vmatprep.subr.mxu0 0.0
    %1932 = vmatpush1.msra.mxu0 0.0
    %1933 = vmatprep.subr.mxu0 0.0
    %1934 = vmatpush1.msra.mxu0 0.0
    %1935 = vmatprep.mubr.f32.mxu0 0.0
    %1936 = vmatmul.mubr.f32.gmra.mrb[0].mxu0 %v1869
    %v1937 = vpop.f32.mrb[0].mxu0
    %v1938 = vadd.f32 %v40, %v1937
    %v1939 = vpop.f32.mrb[0].mxu0
    %1940 = vdwg.mxu0
    %s1941 = scalar_lea.vmem [#allocation2], 6
    %1942 = vst.msk [vmem:[%s1941] sm:$0x3] %vm1203, %v1938
    // Predicated region
    $region18: #{seq2seq_forward.1} parent=1 // pred_check
      _
    $region19: #{seq2seq_forward.1} parent=1 // pred_check_branch
      %1944 = sbr.rel (0) target = $region21
    $region20: #{seq2seq_forward.1} parent=1 // pred_region
      %s1946 = ssub.s32 128, 128
      %1947 = vsyncadd [#allocation3], %s1946
      %s1948 = sshll.u32 [#allocation2], 4
      %s1949 = int_to_ptr.vmem [resolvable:$true] %s1948
      %1954 = dma.vmem_to_hbm [thread:$0]  %s1949, 128, %s4, [#allocation3], 32, 32, 2
    $region21: #{seq2seq_forward.1} parent=1 // pred_fallthru
      _
    // Predicated region
    $region22: #{seq2seq_forward.1} parent=1 // pred_check
      _
    $region23: #{seq2seq_forward.1} parent=1 // pred_check_branch
      %1956 = sbr.rel (0) target = $region25
    $region24: #{seq2seq_forward.1} parent=1 // pred_region
      %1957 = dma.done [#allocation3], 128
    $region25: #{seq2seq_forward.1} parent=1 // pred_fallthru
      _
    %1958 = vsyncpa [#allocation3], 1

</llo_original>
